<compile_context>
chip_gen: v7x
topology: tpu7x:2x2x1
jax: 0.10.0
libtpu: 0.0.40
codegen_flags: <defaults>
</compile_context>

<pallas_src>
import numpy as np
import jax
import jax.numpy as jnp
from jax import lax
from jax.experimental import pallas as pl
from jax.experimental.pallas import tpu as pltpu

_EPS = 1e-12      # matches F.normalize eps
_TINY = 1e-37     # log() underflow guard


def _round_up(x, m):
    return (x + m - 1) // m * m


def _choose_row_tile(bs):
    bs128 = _round_up(bs, 128)
    if bs128 <= 256:
        return bs128                      # single block
    tm = 256                              # fills the 256-wide MXU on v6e/v7x
    # keep ~6 live f32 (tm, bs_pad) tiles under ~24 MiB
    while tm > 128 and 6 * tm * _round_up(bs, tm) * 4 > 24 * (1 << 20):
        tm //= 2
    return tm


def relic_loss(zi, zj, z_orig, *, normalize=True, temperature=1.0, alpha=0.5):
    bs, d = zi.shape
    tm = _choose_row_tile(bs)
    bs_pad = _round_up(bs, tm)
    d_pad = _round_up(d, 128)
    n_blocks = bs_pad // tm
    needs_mask = bs_pad != bs
    inv_t = 1.0 / float(temperature)
    alpha = float(alpha)
    f32 = jnp.float32

    zi = zi.astype(f32)
    zj = zj.astype(f32)
    zo = z_orig.astype(f32)

    if normalize:
        def _l2n(x):  # F.normalize semantics: x / max(||x||, eps)
            n2 = jnp.sum(x * x, axis=-1, keepdims=True)
            return x * lax.rsqrt(jnp.maximum(n2, _EPS * _EPS))
        zi, zj, zo = _l2n(zi), _l2n(zj), _l2n(zo)
        m_arr = jnp.full((1, 1), inv_t, f32)          # cosine logits <= 1/T
    else:
        # Cauchy-Schwarz bound on every logit: (max row norm)^2 / T
        mx = jnp.maximum(
            jnp.max(jnp.sum(zi * zi, axis=-1)),
            jnp.maximum(jnp.max(jnp.sum(zj * zj, axis=-1)),
                        jnp.max(jnp.sum(zo * zo, axis=-1))))
        m_arr = (mx * inv_t).reshape(1, 1).astype(f32)

    def _pad(x):
        return jnp.pad(x, ((0, bs_pad - bs), (0, d_pad - d)))

    zi_k = _pad(zi).astype(jnp.bfloat16)   # resident MXU keys, normalized once
    zj_k = _pad(zj).astype(jnp.bfloat16)
    zo_p = _pad(zo)                        # element-wise use only -> stays f32

    def kernel(m_ref, zi_ref, zj_ref, zo_ref, o_ref,
               sj_acc, acc_lse, acc_pos, acc_sio, acc_sjo, acc_a, acc_b):
        b = pl.program_id(0)
        nb = pl.num_programs(0)

        @pl.when(b == 0)
        def _init():
            sj_acc[...] = jnp.zeros_like(sj_acc)
            acc_lse[...] = jnp.zeros_like(acc_lse)
            acc_pos[...] = jnp.zeros_like(acc_pos)
            acc_sio[...] = jnp.zeros_like(acc_sio)
            acc_sjo[...] = jnp.zeros_like(acc_sjo)
            acc_a[...] = jnp.zeros_like(acc_a)
            acc_b[...] = jnp.zeros_like(acc_b)

        m = m_ref[0, 0]                               # stabilizer (>= every logit)
        row0 = pl.multiple_of(b * tm, tm)

        qi_h = zi_ref[pl.ds(row0, tm), :]             # (tm, d) bf16 query blocks
        qj_h = zj_ref[pl.ds(row0, tm), :]
        ki_h = zi_ref[...]                            # (bs_pad, d) bf16 resident keys
        kj_h = zj_ref[...]

        dims = (((1,), (1,)), ((), ()))               # contract features: A @ B.T

        def sim(a, bm):
            return lax.dot_general(
                a, bm, dimension_numbers=dims,
                preferred_element_type=jnp.float32) * inv_t

        # Diagonal positions of this row block inside the (tm, bs_pad) tiles.
        col_ids = lax.broadcasted_iota(jnp.int32, (tm, bs_pad), 1)
        row_ids = lax.broadcasted_iota(jnp.int32, (tm, bs_pad), 0) + row0
        is_diag = col_ids == row_ids

        if needs_mask:
            col_valid = (lax.broadcasted_iota(jnp.int32, (1, bs_pad), 1)
                         < bs).astype(jnp.float32)                      # (1, bs_pad)
            row_valid = ((lax.broadcasted_iota(jnp.int32, (tm, 1), 0) + row0)
                         < bs).astype(jnp.float32)                      # (tm, 1)

        # ---- contrastive, i-half (rows of this block) ----
        e_ij = jnp.exp(sim(qi_h, kj_h) - m)           # diag kept (it is the positive)
        e_ii = jnp.exp(sim(qi_h, ki_h) - m)
        e_ii = jnp.where(is_diag, 0.0, e_ii)          # drop exact MXU ii diagonal
        ti = e_ij + e_ii
        if needs_mask:
            ti = ti * col_valid
        lse_i = m + jnp.log(jnp.maximum(
            jnp.sum(ti, axis=1, keepdims=True), _TINY))                 # (tm, 1)

        qi_f = qi_h.astype(jnp.float32)
        qj_f = qj_h.astype(jnp.float32)
        pos = jnp.sum(qi_f * qj_f, axis=-1, keepdims=True) * inv_t      # ij diagonal
        if needs_mask:
            lse_i = lse_i * row_valid
            pos = pos * row_valid
        acc_lse[...] += jnp.sum(lse_i, axis=0, keepdims=True)
        acc_pos[...] += jnp.sum(pos, axis=0, keepdims=True)

        # ---- contrastive, j-half: accumulate column exp-sums across blocks ----
        # logits_ji == logits_ij.T -> column sums of e_ij; jj is symmetric so
        # its accumulated column sums equal the row sums the loss needs.
        e_jj = jnp.exp(sim(qj_h, kj_h) - m)
        e_jj = jnp.where(is_diag, 0.0, e_jj)          # drop exact MXU jj diagonal
        tj = e_ij + e_jj
        if needs_mask:
            tj = tj * row_valid
        sj_acc[...] += jnp.sum(tj, axis=0, keepdims=True)               # (1, bs_pad)

        # ---- KL term: only diagonals of logits_io / logits_jo are needed ----
        zo_f = zo_ref[...]                                              # (tm, d) f32
        d_io = jnp.sum(qi_f * zo_f, axis=-1, keepdims=True) * inv_t
        d_jo = jnp.sum(qj_f * zo_f, axis=-1, keepdims=True) * inv_t
        e_io = jnp.exp(d_io - m)
        e_jo = jnp.exp(d_jo - m)
        if needs_mask:
            e_io = e_io * row_valid
            e_jo = e_jo * row_valid
        acc_sio[...] += jnp.sum(e_io, axis=0, keepdims=True)
        acc_sjo[...] += jnp.sum(e_jo, axis=0, keepdims=True)
        acc_a[...] += jnp.sum(e_jo * (d_jo - m), axis=0, keepdims=True)
        acc_b[...] += jnp.sum(e_jo * e_io, axis=0, keepdims=True)

        # ---- finalize on the last row block ----
        @pl.when(b == nb - 1)
        def _fin():
            lse_j = m + jnp.log(jnp.maximum(sj_acc[...], _TINY))        # (1, bs_pad)
            if needs_mask:
                lse_j_m = lse_j * col_valid
            else:
                lse_j_m = lse_j
            sum_lse_j = jnp.sum(lse_j_m, axis=1, keepdims=True)         # (1, 1)
            contrastive = (acc_lse[...] + sum_lse_j
                           - 2.0 * acc_pos[...]) / float(2 * bs)
            # F.kl_div(softmax(d_io), log_softmax(d_jo), log_target=True, 'sum')
            #   = sum_k p_jo * (logp_jo - q_io)         (faithful to the module)
            s_io = acc_sio[...]
            s_jo = acc_sjo[...]
            kl = (acc_a[...] / s_jo - jnp.log(s_jo)
                  - acc_b[...] / (s_jo * s_io))
            o_ref[...] = contrastive + alpha * kl

    grid_spec = pltpu.PrefetchScalarGridSpec(
        num_scalar_prefetch=0,
        grid=(n_blocks,),
        in_specs=[
            pl.BlockSpec(memory_space=pltpu.MemorySpace.SMEM),      # stabilizer m
            pl.BlockSpec(memory_space=pltpu.MemorySpace.VMEM),      # zi keys (resident)
            pl.BlockSpec(memory_space=pltpu.MemorySpace.VMEM),      # zj keys (resident)
            pl.BlockSpec((tm, d_pad), lambda i: (i, 0)),            # zo blocks (streamed)
        ],
        out_specs=pl.BlockSpec((1, 1), lambda i: (0, 0)),
        scratch_shapes=[
            pltpu.VMEM((1, bs_pad), f32),   # j-half column exp-sum accumulator
            pltpu.VMEM((1, 1), f32),        # sum of lse_i over valid rows
            pltpu.VMEM((1, 1), f32),        # sum of positives (ij diagonal)
            pltpu.VMEM((1, 1), f32),        # S_io
            pltpu.VMEM((1, 1), f32),        # S_jo
            pltpu.VMEM((1, 1), f32),        # A = sum e_jo * (d_jo - m)
            pltpu.VMEM((1, 1), f32),        # B = sum e_jo * e_io
        ],
    )

    out = pl.pallas_call(
        kernel,
        grid_spec=grid_spec,
        out_shape=jax.ShapeDtypeStruct((1, 1), f32),
        compiler_params=pltpu.CompilerParams(
            dimension_semantics=("arbitrary",),      # grid axis is a reduction
            vmem_limit_bytes=32 * 1024 * 1024),
    )(m_arr, zi_k, zj_k, zo_p)
    return out[0, 0]


def _ref_loss(zi, zj, zo, normalize=True, temperature=1.0, alpha=0.5):
    """Pure numpy float64 reference mirroring the PyTorch forward."""
    zi = np.asarray(zi, np.float64)
    zj = np.asarray(zj, np.float64)
    zo = np.asarray(zo, np.float64)
    bs = zi.shape[0]

    def norm(x):
        return x / np.maximum(np.linalg.norm(x, axis=-1, keepdims=True), _EPS)

    if normalize:
        zi, zj, zo = norm(zi), norm(zj), norm(zo)
    t = temperature
    lii, lij = zi @ zi.T / t, zi @ zj.T / t
    lji, ljj = zj @ zi.T / t, zj @ zj.T / t
    lio, ljo = zi @ zo.T / t, zj @ zo.T / t

    mask = ~np.eye(bs, dtype=bool)
    pos = np.concatenate([lij[~mask], lji[~mask]])[:, None]
    neg_i = np.concatenate([lii[mask].reshape(bs, -1), lij[mask].reshape(bs, -1)], 1)
    neg_j = np.concatenate([lji[mask].reshape(bs, -1), ljj[mask].reshape(bs, -1)], 1)
    neg = np.concatenate([neg_i, neg_j], 0)
    logits = np.concatenate([pos, neg], 1)

    m = logits.max(axis=1, keepdims=True)
    lse = m[:, 0] + np.log(np.exp(logits - m).sum(axis=1))
    ce = np.mean(lse - logits[:, 0])

    dio, djo = lio[~mask], ljo[~mask]
    q = np.exp(dio - dio.max())
    q = q / q.sum()
    logp = djo - (djo.max() + np.log(np.exp(djo - djo.max()).sum()))
    p = np.exp(logp)
    kl = np.sum(p * (logp - q))
    return ce + alpha * kl


if __name__ == "__main__":
    key = jax.random.PRNGKey(0)
    # (8, 32): single row block, heavy padding/masking path.
    # (300, 48): two 256-row blocks with a ragged last block, exercising the
    # cross-block (1, bs) column-sum accumulator.
    for bs, d in [(8, 32), (300, 48)]:
        key, k1, k2, k3 = jax.random.split(key, 4)
        zi = jax.random.normal(k1, (bs, d), dtype=jnp.float32)
        zj = jax.random.normal(k2, (bs, d), dtype=jnp.float32)
        zo = jax.random.normal(k3, (bs, d), dtype=jnp.float32)

        loss = jax.block_until_ready(relic_loss(zi, zj, zo))
        ref = _ref_loss(zi, zj, zo)

        assert np.isfinite(float(loss)), "kernel produced non-finite loss"
        # bf16 MXU operands (f32 accumulate) -> <~5e-3 deviation vs f64 ref.
        np.testing.assert_allclose(float(loss), ref, rtol=1e-2, atol=1e-2)
    print("KERNEL_OK")
</pallas_src>

<mosaic_0001>
module attributes {stable_mosaic.version = 11 : i64} {
  func.func @kernel(%arg0: i32, %arg1: memref<1x1xf32, #tpu.memory_space<smem>>, %arg2: memref<128x128xbf16, #tpu.memory_space<vmem>>, %arg3: memref<128x128xbf16, #tpu.memory_space<vmem>>, %arg4: memref<128x128xf32, #tpu.memory_space<vmem>>, %arg5: memref<1x1xf32, #tpu.memory_space<vmem>>, %arg6: memref<1x128xf32, #tpu.memory_space<vmem>>, %arg7: memref<1x1xf32, #tpu.memory_space<vmem>>, %arg8: memref<1x1xf32, #tpu.memory_space<vmem>>, %arg9: memref<1x1xf32, #tpu.memory_space<vmem>>, %arg10: memref<1x1xf32, #tpu.memory_space<vmem>>, %arg11: memref<1x1xf32, #tpu.memory_space<vmem>>, %arg12: memref<1x1xf32, #tpu.memory_space<vmem>>) attributes {dimension_semantics = [#tpu.dimension_semantics<arbitrary>], iteration_bounds = array<i64: 1>, scalar_prefetch = 0 : i64, scratch_operands = 7 : i64, tpu.core_type = #tpu.core_type<tc>, window_params = [{transform_indices = @transform_0, window_bounds = array<i64: 1, 1>}, {pipeline_mode = #tpu.pipeline_mode<synchronous>, transform_indices = @transform_1, window_bounds = array<i64: 128, 128>}, {pipeline_mode = #tpu.pipeline_mode<synchronous>, transform_indices = @transform_2, window_bounds = array<i64: 128, 128>}, {transform_indices = @transform_3, window_bounds = array<i64: 128, 128>}, {pipeline_mode = #tpu.pipeline_mode<synchronous>, transform_indices = @transform_4, window_bounds = array<i64: 1, 1>}]} {
    %c0_i32 = arith.constant 0 : i32
    %0 = arith.cmpi eq, %arg0, %c0_i32 : i32
    %1 = arith.extui %0 : i1 to i32
    %c0_i32_0 = arith.constant 0 : i32
    %2 = arith.cmpi ne, %1, %c0_i32_0 : i32
    scf.if %2 {
      %cst_63 = arith.constant 0.000000e+00 : f32
      %134 = vector.broadcast %cst_63 : f32 to vector<1x128xf32>
      %c0_64 = arith.constant 0 : index
      %c0_65 = arith.constant 0 : index
      %135 = vector.load %arg6[%c0_64, %c0_65] : memref<1x128xf32, #tpu.memory_space<vmem>>, vector<1x128xf32>
      tpu.vector_store %arg6[%c0_64, %c0_65], %134 {strides = array<i32>} : memref<1x128xf32, #tpu.memory_space<vmem>>, vector<1x128xf32>,
      %cst_66 = arith.constant 0.000000e+00 : f32
      %136 = vector.broadcast %cst_66 : f32 to vector<1x1xf32>
      %c0_67 = arith.constant 0 : index
      %c0_68 = arith.constant 0 : index
      %137 = vector.load %arg7[%c0_67, %c0_68] : memref<1x1xf32, #tpu.memory_space<vmem>>, vector<1x1xf32>
      tpu.vector_store %arg7[%c0_67, %c0_68], %136 {strides = array<i32>} : memref<1x1xf32, #tpu.memory_space<vmem>>, vector<1x1xf32>,
      %cst_69 = arith.constant 0.000000e+00 : f32
      %138 = vector.broadcast %cst_69 : f32 to vector<1x1xf32>
      %c0_70 = arith.constant 0 : index
      %c0_71 = arith.constant 0 : index
      %139 = vector.load %arg8[%c0_70, %c0_71] : memref<1x1xf32, #tpu.memory_space<vmem>>, vector<1x1xf32>
      tpu.vector_store %arg8[%c0_70, %c0_71], %138 {strides = array<i32>} : memref<1x1xf32, #tpu.memory_space<vmem>>, vector<1x1xf32>,
      %cst_72 = arith.constant 0.000000e+00 : f32
      %140 = vector.broadcast %cst_72 : f32 to vector<1x1xf32>
      %c0_73 = arith.constant 0 : index
      %c0_74 = arith.constant 0 : index
      %141 = vector.load %arg9[%c0_73, %c0_74] : memref<1x1xf32, #tpu.memory_space<vmem>>, vector<1x1xf32>
      tpu.vector_store %arg9[%c0_73, %c0_74], %140 {strides = array<i32>} : memref<1x1xf32, #tpu.memory_space<vmem>>, vector<1x1xf32>,
      %cst_75 = arith.constant 0.000000e+00 : f32
      %142 = vector.broadcast %cst_75 : f32 to vector<1x1xf32>
      %c0_76 = arith.constant 0 : index
      %c0_77 = arith.constant 0 : index
      %143 = vector.load %arg10[%c0_76, %c0_77] : memref<1x1xf32, #tpu.memory_space<vmem>>, vector<1x1xf32>
      tpu.vector_store %arg10[%c0_76, %c0_77], %142 {strides = array<i32>} : memref<1x1xf32, #tpu.memory_space<vmem>>, vector<1x1xf32>,
      %cst_78 = arith.constant 0.000000e+00 : f32
      %144 = vector.broadcast %cst_78 : f32 to vector<1x1xf32>
      %c0_79 = arith.constant 0 : index
      %c0_80 = arith.constant 0 : index
      %145 = vector.load %arg11[%c0_79, %c0_80] : memref<1x1xf32, #tpu.memory_space<vmem>>, vector<1x1xf32>
      tpu.vector_store %arg11[%c0_79, %c0_80], %144 {strides = array<i32>} : memref<1x1xf32, #tpu.memory_space<vmem>>, vector<1x1xf32>,
      %cst_81 = arith.constant 0.000000e+00 : f32
      %146 = vector.broadcast %cst_81 : f32 to vector<1x1xf32>
      %c0_82 = arith.constant 0 : index
      %c0_83 = arith.constant 0 : index
      %147 = vector.load %arg12[%c0_82, %c0_83] : memref<1x1xf32, #tpu.memory_space<vmem>>, vector<1x1xf32>
      tpu.vector_store %arg12[%c0_82, %c0_83], %146 {strides = array<i32>} : memref<1x1xf32, #tpu.memory_space<vmem>>, vector<1x1xf32>,
    } else {
    }
    %c0 = arith.constant 0 : index
    %c0_1 = arith.constant 0 : index
    %3 = memref.load %arg1[%c0, %c0_1] : memref<1x1xf32, #tpu.memory_space<smem>>
    %c128_i32 = arith.constant 128 : i32
    %4 = arith.muli %arg0, %c128_i32 : i32
    %5 = tpu.assume_multiple %4, 128 : i32
    %6 = arith.index_cast %5 : i32 to index
    %c0_2 = arith.constant 0 : index
    %7 = vector.load %arg2[%6, %c0_2] : memref<128x128xbf16, #tpu.memory_space<vmem>>, vector<128x128xbf16>
    %8 = arith.index_cast %5 : i32 to index
    %c0_3 = arith.constant 0 : index
    %9 = vector.load %arg3[%8, %c0_3] : memref<128x128xbf16, #tpu.memory_space<vmem>>, vector<128x128xbf16>
    %c0_4 = arith.constant 0 : index
    %c0_5 = arith.constant 0 : index
    %10 = vector.load %arg2[%c0_4, %c0_5] : memref<128x128xbf16, #tpu.memory_space<vmem>>, vector<128x128xbf16>
    %c0_6 = arith.constant 0 : index
    %c0_7 = arith.constant 0 : index
    %11 = vector.load %arg3[%c0_6, %c0_7] : memref<128x128xbf16, #tpu.memory_space<vmem>>, vector<128x128xbf16>
    %12 = tpu.iota {dimensions = array<i32: 1>} : vector<128x128xi32>
    %13 = tpu.iota {dimensions = array<i32: 0>} : vector<128x128xi32>
    %14 = vector.broadcast %5 : i32 to vector<128x128xi32>
    %15 = arith.addi %13, %14 : vector<128x128xi32>
    %16 = arith.cmpi eq, %12, %15 : vector<128x128xi32>
    %17 = tpu.iota {dimensions = array<i32: 1>} : vector<1x128xi32>
    %c8_i32 = arith.constant 8 : i32
    %18 = vector.broadcast %c8_i32 : i32 to vector<1x128xi32>
    %19 = arith.cmpi slt, %17, %18 : vector<1x128xi32>
    %20 = arith.extui %19 : vector<1x128xi1> to vector<1x128xi32>
    %21 = arith.sitofp %20 : vector<1x128xi32> to vector<1x128xf32>
    %22 = tpu.iota {dimensions = array<i32: 0>} : vector<128x1xi32>
    %23 = vector.broadcast %5 : i32 to vector<128x1xi32>
    %24 = arith.addi %22, %23 : vector<128x1xi32>
    %c8_i32_8 = arith.constant 8 : i32
    %25 = vector.broadcast %c8_i32_8 : i32 to vector<128x1xi32>
    %26 = arith.cmpi slt, %24, %25 : vector<128x1xi32>
    %27 = arith.extui %26 : vector<128x1xi1> to vector<128x1xi32>
    %28 = arith.sitofp %27 : vector<128x1xi32> to vector<128x1xf32>
    %cst = arith.constant dense<0.000000e+00> : vector<128x128xf32>
    %29 = tpu.matmul %7, %11, %cst {dimension_numbers = #tpu.dot_dimension_numbers<[1], [1], [0], [0], [0, 0, 1, 0], [], []>} : vector<128x128xbf16>, vector<128x128xbf16>, vector<128x128xf32> -> vector<128x128xf32>
    %cst_9 = arith.constant 1.000000e+00 : f32
    %30 = vector.broadcast %cst_9 : f32 to vector<128x128xf32>
    %31 = arith.mulf %29, %30 : vector<128x128xf32>
    %32 = vector.broadcast %3 : f32 to vector<128x128xf32>
    %33 = arith.subf %31, %32 : vector<128x128xf32>
    %34 = math.exp %33 : vector<128x128xf32>
    %cst_10 = arith.constant dense<0.000000e+00> : vector<128x128xf32>
    %35 = tpu.matmul %7, %10, %cst_10 {dimension_numbers = #tpu.dot_dimension_numbers<[1], [1], [0], [0], [0, 0, 1, 0], [], []>} : vector<128x128xbf16>, vector<128x128xbf16>, vector<128x128xf32> -> vector<128x128xf32>
    %cst_11 = arith.constant 1.000000e+00 : f32
    %36 = vector.broadcast %cst_11 : f32 to vector<128x128xf32>
    %37 = arith.mulf %35, %36 : vector<128x128xf32>
    %38 = vector.broadcast %3 : f32 to vector<128x128xf32>
    %39 = arith.subf %37, %38 : vector<128x128xf32>
    %40 = math.exp %39 : vector<128x128xf32>
    %cst_12 = arith.constant 0.000000e+00 : f32
    %41 = vector.broadcast %cst_12 : f32 to vector<128x128xf32>
    %42 = arith.select %16, %41, %40 : vector<128x128xi1>, vector<128x128xf32>
    %43 = arith.addf %34, %42 : vector<128x128xf32>
    %44 = vector.broadcast %21 : vector<1x128xf32> to vector<128x128xf32>
    %45 = arith.mulf %43, %44 : vector<128x128xf32>
    %cst_13 = arith.constant dense<0.000000e+00> : vector<128xf32>
    %46 = vector.multi_reduction <add>, %45, %cst_13 [1] : vector<128x128xf32> to vector<128xf32>
    %47 = vector.shape_cast %46 : vector<128xf32> to vector<128x1xf32>
    %cst_14 = arith.constant 9.99999991E-38 : f32
    %48 = vector.broadcast %cst_14 : f32 to vector<128x1xf32>
    %49 = arith.maximumf %47, %48 : vector<128x1xf32>
    %50 = math.log %49 : vector<128x1xf32>
    %51 = vector.broadcast %3 : f32 to vector<128x1xf32>
    %52 = arith.addf %51, %50 : vector<128x1xf32>
    %53 = arith.extf %7 : vector<128x128xbf16> to vector<128x128xf32>
    %54 = arith.extf %9 : vector<128x128xbf16> to vector<128x128xf32>
    %55 = arith.mulf %53, %54 : vector<128x128xf32>
    %cst_15 = arith.constant dense<0.000000e+00> : vector<128xf32>
    %56 = vector.multi_reduction <add>, %55, %cst_15 [1] : vector<128x128xf32> to vector<128xf32>
    %57 = vector.shape_cast %56 : vector<128xf32> to vector<128x1xf32>
    %cst_16 = arith.constant 1.000000e+00 : f32
    %58 = vector.broadcast %cst_16 : f32 to vector<128x1xf32>
    %59 = arith.mulf %57, %58 : vector<128x1xf32>
    %60 = arith.mulf %52, %28 : vector<128x1xf32>
    %61 = arith.mulf %59, %28 : vector<128x1xf32>
    %c0_17 = arith.constant 0 : index
    %c0_18 = arith.constant 0 : index
    %62 = vector.load %arg7[%c0_17, %c0_18] : memref<1x1xf32, #tpu.memory_space<vmem>>, vector<1x1xf32>
    %cst_19 = arith.constant dense<0.000000e+00> : vector<1xf32>
    %63 = vector.multi_reduction <add>, %60, %cst_19 [0] : vector<128x1xf32> to vector<1xf32>
    %64 = vector.shape_cast %63 : vector<1xf32> to vector<1x1xf32>
    %65 = arith.addf %62, %64 : vector<1x1xf32>
    %c0_20 = arith.constant 0 : index
    %c0_21 = arith.constant 0 : index
    %66 = vector.load %arg7[%c0_20, %c0_21] : memref<1x1xf32, #tpu.memory_space<vmem>>, vector<1x1xf32>
    tpu.vector_store %arg7[%c0_20, %c0_21], %65 {strides = array<i32>} : memref<1x1xf32, #tpu.memory_space<vmem>>, vector<1x1xf32>,
    %c0_22 = arith.constant 0 : index
    %c0_23 = arith.constant 0 : index
    %67 = vector.load %arg8[%c0_22, %c0_23] : memref<1x1xf32, #tpu.memory_space<vmem>>, vector<1x1xf32>
    %cst_24 = arith.constant dense<0.000000e+00> : vector<1xf32>
    %68 = vector.multi_reduction <add>, %61, %cst_24 [0] : vector<128x1xf32> to vector<1xf32>
    %69 = vector.shape_cast %68 : vector<1xf32> to vector<1x1xf32>
    %70 = arith.addf %67, %69 : vector<1x1xf32>
    %c0_25 = arith.constant 0 : index
    %c0_26 = arith.constant 0 : index
    %71 = vector.load %arg8[%c0_25, %c0_26] : memref<1x1xf32, #tpu.memory_space<vmem>>, vector<1x1xf32>
    tpu.vector_store %arg8[%c0_25, %c0_26], %70 {strides = array<i32>} : memref<1x1xf32, #tpu.memory_space<vmem>>, vector<1x1xf32>,
    %cst_27 = arith.constant dense<0.000000e+00> : vector<128x128xf32>
    %72 = tpu.matmul %9, %11, %cst_27 {dimension_numbers = #tpu.dot_dimension_numbers<[1], [1], [0], [0], [0, 0, 1, 0], [], []>} : vector<128x128xbf16>, vector<128x128xbf16>, vector<128x128xf32> -> vector<128x128xf32>
    %cst_28 = arith.constant 1.000000e+00 : f32
    %73 = vector.broadcast %cst_28 : f32 to vector<128x128xf32>
    %74 = arith.mulf %72, %73 : vector<128x128xf32>
    %75 = vector.broadcast %3 : f32 to vector<128x128xf32>
    %76 = arith.subf %74, %75 : vector<128x128xf32>
    %77 = math.exp %76 : vector<128x128xf32>
    %cst_29 = arith.constant 0.000000e+00 : f32
    %78 = vector.broadcast %cst_29 : f32 to vector<128x128xf32>
    %79 = arith.select %16, %78, %77 : vector<128x128xi1>, vector<128x128xf32>
    %80 = arith.addf %34, %79 : vector<128x128xf32>
    %81 = vector.broadcast %28 : vector<128x1xf32> to vector<128x128xf32>
    %82 = arith.mulf %80, %81 : vector<128x128xf32>
    %c0_30 = arith.constant 0 : index
    %c0_31 = arith.constant 0 : index
    %83 = vector.load %arg6[%c0_30, %c0_31] : memref<1x128xf32, #tpu.memory_space<vmem>>, vector<1x128xf32>
    %cst_32 = arith.constant dense<0.000000e+00> : vector<128xf32>
    %84 = vector.multi_reduction <add>, %82, %cst_32 [0] : vector<128x128xf32> to vector<128xf32>
    %85 = vector.shape_cast %84 : vector<128xf32> to vector<1x128xf32>
    %86 = arith.addf %83, %85 : vector<1x128xf32>
    %c0_33 = arith.constant 0 : index
    %c0_34 = arith.constant 0 : index
    %87 = vector.load %arg6[%c0_33, %c0_34] : memref<1x128xf32, #tpu.memory_space<vmem>>, vector<1x128xf32>
    tpu.vector_store %arg6[%c0_33, %c0_34], %86 {strides = array<i32>} : memref<1x128xf32, #tpu.memory_space<vmem>>, vector<1x128xf32>,
    %c0_35 = arith.constant 0 : index
    %c0_36 = arith.constant 0 : index
    %88 = vector.load %arg4[%c0_35, %c0_36] : memref<128x128xf32, #tpu.memory_space<vmem>>, vector<128x128xf32>
    %89 = arith.mulf %53, %88 : vector<128x128xf32>
    %cst_37 = arith.constant dense<0.000000e+00> : vector<128xf32>
    %90 = vector.multi_reduction <add>, %89, %cst_37 [1] : vector<128x128xf32> to vector<128xf32>
    %91 = vector.shape_cast %90 : vector<128xf32> to vector<128x1xf32>
    %cst_38 = arith.constant 1.000000e+00 : f32
    %92 = vector.broadcast %cst_38 : f32 to vector<128x1xf32>
    %93 = arith.mulf %91, %92 : vector<128x1xf32>
    %94 = arith.mulf %54, %88 : vector<128x128xf32>
    %cst_39 = arith.constant dense<0.000000e+00> : vector<128xf32>
    %95 = vector.multi_reduction <add>, %94, %cst_39 [1] : vector<128x128xf32> to vector<128xf32>
    %96 = vector.shape_cast %95 : vector<128xf32> to vector<128x1xf32>
    %cst_40 = arith.constant 1.000000e+00 : f32
    %97 = vector.broadcast %cst_40 : f32 to vector<128x1xf32>
    %98 = arith.mulf %96, %97 : vector<128x1xf32>
    %99 = vector.broadcast %3 : f32 to vector<128x1xf32>
    %100 = arith.subf %93, %99 : vector<128x1xf32>
    %101 = math.exp %100 : vector<128x1xf32>
    %102 = vector.broadcast %3 : f32 to vector<128x1xf32>
    %103 = arith.subf %98, %102 : vector<128x1xf32>
    %104 = math.exp %103 : vector<128x1xf32>
    %105 = arith.mulf %101, %28 : vector<128x1xf32>
    %106 = arith.mulf %104, %28 : vector<128x1xf32>
    %c0_41 = arith.constant 0 : index
    %c0_42 = arith.constant 0 : index
    %107 = vector.load %arg9[%c0_41, %c0_42] : memref<1x1xf32, #tpu.memory_space<vmem>>, vector<1x1xf32>
    %cst_43 = arith.constant dense<0.000000e+00> : vector<1xf32>
    %108 = vector.multi_reduction <add>, %105, %cst_43 [0] : vector<128x1xf32> to vector<1xf32>
    %109 = vector.shape_cast %108 : vector<1xf32> to vector<1x1xf32>
    %110 = arith.addf %107, %109 : vector<1x1xf32>
    %c0_44 = arith.constant 0 : index
    %c0_45 = arith.constant 0 : index
    %111 = vector.load %arg9[%c0_44, %c0_45] : memref<1x1xf32, #tpu.memory_space<vmem>>, vector<1x1xf32>
    tpu.vector_store %arg9[%c0_44, %c0_45], %110 {strides = array<i32>} : memref<1x1xf32, #tpu.memory_space<vmem>>, vector<1x1xf32>,
    %c0_46 = arith.constant 0 : index
    %c0_47 = arith.constant 0 : index
    %112 = vector.load %arg10[%c0_46, %c0_47] : memref<1x1xf32, #tpu.memory_space<vmem>>, vector<1x1xf32>
    %cst_48 = arith.constant dense<0.000000e+00> : vector<1xf32>
    %113 = vector.multi_reduction <add>, %106, %cst_48 [0] : vector<128x1xf32> to vector<1xf32>
    %114 = vector.shape_cast %113 : vector<1xf32> to vector<1x1xf32>
    %115 = arith.addf %112, %114 : vector<1x1xf32>
    %c0_49 = arith.constant 0 : index
    %c0_50 = arith.constant 0 : index
    %116 = vector.load %arg10[%c0_49, %c0_50] : memref<1x1xf32, #tpu.memory_space<vmem>>, vector<1x1xf32>
    tpu.vector_store %arg10[%c0_49, %c0_50], %115 {strides = array<i32>} : memref<1x1xf32, #tpu.memory_space<vmem>>, vector<1x1xf32>,
    %c0_51 = arith.constant 0 : index
    %c0_52 = arith.constant 0 : index
    %117 = vector.load %arg11[%c0_51, %c0_52] : memref<1x1xf32, #tpu.memory_space<vmem>>, vector<1x1xf32>
    %118 = vector.broadcast %3 : f32 to vector<128x1xf32>
    %119 = arith.subf %98, %118 : vector<128x1xf32>
    %120 = arith.mulf %106, %119 : vector<128x1xf32>
    %cst_53 = arith.constant dense<0.000000e+00> : vector<1xf32>
    %121 = vector.multi_reduction <add>, %120, %cst_53 [0] : vector<128x1xf32> to vector<1xf32>
    %122 = vector.shape_cast %121 : vector<1xf32> to vector<1x1xf32>
    %123 = arith.addf %117, %122 : vector<1x1xf32>
    %c0_54 = arith.constant 0 : index
    %c0_55 = arith.constant 0 : index
    %124 = vector.load %arg11[%c0_54, %c0_55] : memref<1x1xf32, #tpu.memory_space<vmem>>, vector<1x1xf32>
    tpu.vector_store %arg11[%c0_54, %c0_55], %123 {strides = array<i32>} : memref<1x1xf32, #tpu.memory_space<vmem>>, vector<1x1xf32>,
    %c0_56 = arith.constant 0 : index
    %c0_57 = arith.constant 0 : index
    %125 = vector.load %arg12[%c0_56, %c0_57] : memref<1x1xf32, #tpu.memory_space<vmem>>, vector<1x1xf32>
    %126 = arith.mulf %106, %105 : vector<128x1xf32>
    %cst_58 = arith.constant dense<0.000000e+00> : vector<1xf32>
    %127 = vector.multi_reduction <add>, %126, %cst_58 [0] : vector<128x1xf32> to vector<1xf32>
    %128 = vector.shape_cast %127 : vector<1xf32> to vector<1x1xf32>
    %129 = arith.addf %125, %128 : vector<1x1xf32>
    %c0_59 = arith.constant 0 : index
    %c0_60 = arith.constant 0 : index
    %130 = vector.load %arg12[%c0_59, %c0_60] : memref<1x1xf32, #tpu.memory_space<vmem>>, vector<1x1xf32>
    tpu.vector_store %arg12[%c0_59, %c0_60], %129 {strides = array<i32>} : memref<1x1xf32, #tpu.memory_space<vmem>>, vector<1x1xf32>,
    %c0_i32_61 = arith.constant 0 : i32
    %131 = arith.cmpi eq, %arg0, %c0_i32_61 : i32
    %132 = arith.extui %131 : i1 to i32
    %c0_i32_62 = arith.constant 0 : i32
    %133 = arith.cmpi ne, %132, %c0_i32_62 : i32
    scf.if %133 {
      %c0_63 = arith.constant 0 : index
      %c0_64 = arith.constant 0 : index
      %134 = vector.load %arg6[%c0_63, %c0_64] : memref<1x128xf32, #tpu.memory_space<vmem>>, vector<1x128xf32>
      %cst_65 = arith.constant 9.99999991E-38 : f32
      %135 = vector.broadcast %cst_65 : f32 to vector<1x128xf32>
      %136 = arith.maximumf %134, %135 : vector<1x128xf32>
      %137 = math.log %136 : vector<1x128xf32>
      %138 = vector.broadcast %3 : f32 to vector<1x128xf32>
      %139 = arith.addf %138, %137 : vector<1x128xf32>
      %140 = arith.mulf %139, %21 : vector<1x128xf32>
      %cst_66 = arith.constant dense<0.000000e+00> : vector<1xf32>
      %141 = vector.multi_reduction <add>, %140, %cst_66 [1] : vector<1x128xf32> to vector<1xf32>
      %142 = vector.shape_cast %141 : vector<1xf32> to vector<1x1xf32>
      %c0_67 = arith.constant 0 : index
      %c0_68 = arith.constant 0 : index
      %143 = vector.load %arg7[%c0_67, %c0_68] : memref<1x1xf32, #tpu.memory_space<vmem>>, vector<1x1xf32>
      %144 = arith.addf %143, %142 : vector<1x1xf32>
      %c0_69 = arith.constant 0 : index
      %c0_70 = arith.constant 0 : index
      %145 = vector.load %arg8[%c0_69, %c0_70] : memref<1x1xf32, #tpu.memory_space<vmem>>, vector<1x1xf32>
      %cst_71 = arith.constant 2.000000e+00 : f32
      %146 = vector.broadcast %cst_71 : f32 to vector<1x1xf32>
      %147 = arith.mulf %146, %145 : vector<1x1xf32>
      %148 = arith.subf %144, %147 : vector<1x1xf32>
      %cst_72 = arith.constant 1.600000e+01 : f32
      %149 = vector.broadcast %cst_72 : f32 to vector<1x1xf32>
      %150 = arith.divf %148, %149 : vector<1x1xf32>
      %c0_73 = arith.constant 0 : index
      %c0_74 = arith.constant 0 : index
      %151 = vector.load %arg9[%c0_73, %c0_74] : memref<1x1xf32, #tpu.memory_space<vmem>>, vector<1x1xf32>
      %c0_75 = arith.constant 0 : index
      %c0_76 = arith.constant 0 : index
      %152 = vector.load %arg10[%c0_75, %c0_76] : memref<1x1xf32, #tpu.memory_space<vmem>>, vector<1x1xf32>
      %c0_77 = arith.constant 0 : index
      %c0_78 = arith.constant 0 : index
      %153 = vector.load %arg11[%c0_77, %c0_78] : memref<1x1xf32, #tpu.memory_space<vmem>>, vector<1x1xf32>
      %154 = arith.divf %153, %152 : vector<1x1xf32>
      %155 = math.log %152 : vector<1x1xf32>
      %156 = arith.subf %154, %155 : vector<1x1xf32>
      %c0_79 = arith.constant 0 : index
      %c0_80 = arith.constant 0 : index
      %157 = vector.load %arg12[%c0_79, %c0_80] : memref<1x1xf32, #tpu.memory_space<vmem>>, vector<1x1xf32>
      %158 = arith.mulf %152, %151 : vector<1x1xf32>
      %159 = arith.divf %157, %158 : vector<1x1xf32>
      %160 = arith.subf %156, %159 : vector<1x1xf32>
      %cst_81 = arith.constant 5.000000e-01 : f32
      %161 = vector.broadcast %cst_81 : f32 to vector<1x1xf32>
      %162 = arith.mulf %161, %160 : vector<1x1xf32>
      %163 = arith.addf %150, %162 : vector<1x1xf32>
      %c0_82 = arith.constant 0 : index
      %c0_83 = arith.constant 0 : index
      %164 = vector.load %arg5[%c0_82, %c0_83] : memref<1x1xf32, #tpu.memory_space<vmem>>, vector<1x1xf32>
      tpu.vector_store %arg5[%c0_82, %c0_83], %163 {strides = array<i32>} : memref<1x1xf32, #tpu.memory_space<vmem>>, vector<1x1xf32>,
    } else {
    }
    return
  }
  func.func @transform_0(%arg0: i32) -> (i32, i32) {
    %c0_i32 = arith.constant 0 : i32
    %c0_i32_0 = arith.constant 0 : i32
    %c0_i32_1 = arith.constant 0 : i32
    return %c0_i32, %c0_i32_0 : i32, i32
  }
  func.func @transform_1(%arg0: i32) -> (i32, i32) {
    %c0_i32 = arith.constant 0 : i32
    %c0_i32_0 = arith.constant 0 : i32
    %c0_i32_1 = arith.constant 0 : i32
    return %c0_i32, %c0_i32_0 : i32, i32
  }
  func.func @transform_2(%arg0: i32) -> (i32, i32) {
    %c0_i32 = arith.constant 0 : i32
    %c0_i32_0 = arith.constant 0 : i32
    %c0_i32_1 = arith.constant 0 : i32
    return %c0_i32, %c0_i32_0 : i32, i32
  }
  func.func @transform_3(%arg0: i32) -> (i32, i32) {
    %c0_i32 = arith.constant 0 : i32
    %c0_i32_0 = arith.constant 0 : i32
    return %arg0, %c0_i32 : i32, i32
  }
  func.func @transform_4(%arg0: i32) -> (i32, i32) {
    %c0_i32 = arith.constant 0 : i32
    %c0_i32_0 = arith.constant 0 : i32
    %c0_i32_1 = arith.constant 0 : i32
    return %c0_i32, %c0_i32_0 : i32, i32
  }
}

</mosaic_0001>

<llo_original>
// kernel: tpu_custom_call.1
$region0: #{tpu_custom_call.1}
  #allocation0 [shape = 'u32[]', space=smem, size = 0x4, offset = 0x4, fixed_abs, tag = 'smem constant byte address 0x4 - core index']
  #allocation1 [shape = 'u32[144,128]{1,0:T(1,128)}', space=vmem, size = 0x12000, scoped, tag = 'internal scratch']
  #allocation2 [shape = 'f32[1,128]{1,0:T(1,128)}', space=vmem, size = 0x200, scoped, tag = 'scratch operand']
  #allocation3 [shape = 'f32[1,1]{1,0:T(1,128)}', space=vmem, size = 0x200, scoped, tag = 'scratch operand']
  #allocation4 [shape = 'f32[1,1]{1,0:T(1,128)}', space=vmem, size = 0x200, scoped, tag = 'scratch operand']
  #allocation5 [shape = 'f32[1,1]{1,0:T(1,128)}', space=vmem, size = 0x200, scoped, tag = 'scratch operand']
  #allocation6 [shape = 'f32[1,1]{1,0:T(1,128)}', space=vmem, size = 0x200, scoped, tag = 'scratch operand']
  #allocation7 [shape = 'f32[1,1]{1,0:T(1,128)}', space=vmem, size = 0x200, scoped, tag = 'scratch operand']
  #allocation8 [shape = 'f32[1,1]{1,0:T(1,128)}', space=vmem, size = 0x200, scoped, tag = 'scratch operand']
  #allocation9 [shape = 'f32[1,1]{1,0:T(1,128)S(6)}', space=smem, size = 0x200, scoped, tag = 'scoped memory for tpu_custom_call.1']
  %s0 = inlined_call_operand.<no memory space> [shape: f32[1,1], index: 0, kind: input, shape index: {}]
  %s1 = inlined_call_operand.hbm [shape: bf16[128,128], index: 1, kind: input, shape index: {}]
  %s2 = inlined_call_operand.hbm [shape: bf16[128,128], index: 2, kind: input, shape index: {}]
  %s3 = inlined_call_operand.hbm [shape: f32[128,128], index: 3, kind: input, shape index: {}]
  %s4 = inlined_call_operand.hbm [shape: f32[1,1], index: 4, kind: output, shape index: {}]
  %s5 = sld [smem:[#allocation0]]
  $region46: #{tpu_custom_call.1} parent=0
    _
  %s7 = ssub.s32 1, %s5
  %s8 = scalar_select 0, %s7, %s5
  %9 = sst [smem:[#allocation9]] %s0
  $region1: #{tpu_custom_call.1} parent=0
    #allocation10 [shape = 'u8[32768]{0}', space=vmem, size = 0x8000, scoped, tag = 'input window, operand 1, single buffered']
    #allocation11 [shape = 's32[1]{0}', space=sflag, size = 0x4, scoped, tag = 'scoped memory for tpu_custom_call.1']
    #allocation12 [shape = 's32[1]{0}', space=sflag, size = 0x4, scoped, tag = 'scoped memory for tpu_custom_call.1']
    #allocation13 [shape = 'u8[32768]{0}', space=vmem, size = 0x8000, scoped, tag = 'input window, operand 2, single buffered']
    #allocation14 [shape = 's32[1]{0}', space=sflag, size = 0x4, scoped, tag = 'scoped memory for tpu_custom_call.1']
    #allocation15 [shape = 'u8[65536]{0}', space=vmem, size = 0x10000, scoped, tag = 'input window, operand 3, single buffered']
    #allocation16 [shape = 'u8[512]{0}', space=vmem, size = 0x400, scoped, tag = 'output window, operand 0, single buffered']
    %10 = vsyncpa [#allocation11], 0
    %11 = vsyncpa [#allocation14], 0
    %12 = vsyncpa [#allocation12], 0
    // Predicated region
    $region2: #{tpu_custom_call.1} parent=1 // pred_check
      _
    $region3: #{tpu_custom_call.1} parent=1 // pred_check_branch
      %14 = sbr.rel (0) target = $region5
    $region4: #{tpu_custom_call.1} parent=1 // pred_region
      _
    $region5: #{tpu_custom_call.1} parent=1 // pred_fallthru
      _
    // Predicated region
    $region6: #{tpu_custom_call.1} parent=1 // pred_check
      _
    $region7: #{tpu_custom_call.1} parent=1 // pred_check_branch
      %16 = sbr.rel (0) target = $region9
    $region8: #{tpu_custom_call.1} parent=1 // pred_region
      %s18 = ssub.s32 1024, 1024
      %19 = vsyncadd [#allocation11], %s18
      %s20 = sshll.u32 [#allocation10], 4
      %s21 = int_to_ptr.vmem [resolvable:$true] %s20
      %26 = dma.hbm_to_vmem [thread:$0]  %s1, 1024, %s21, [#allocation11], 64, 64, 4
    $region9: #{tpu_custom_call.1} parent=1 // pred_fallthru
      _
    // Predicated region
    $region10: #{tpu_custom_call.1} parent=1 // pred_check
      _
    $region11: #{tpu_custom_call.1} parent=1 // pred_check_branch
      %28 = sbr.rel (0) target = $region13
    $region12: #{tpu_custom_call.1} parent=1 // pred_region
      %s30 = ssub.s32 1024, 1024
      %31 = vsyncadd [#allocation14], %s30
      %s32 = sshll.u32 [#allocation13], 4
      %s33 = int_to_ptr.vmem [resolvable:$true] %s32
      %38 = dma.hbm_to_vmem [thread:$0]  %s2, 1024, %s33, [#allocation14], 64, 64, 4
    $region13: #{tpu_custom_call.1} parent=1 // pred_fallthru
      _
    // Predicated region
    $region14: #{tpu_custom_call.1} parent=1 // pred_check
      _
    $region15: #{tpu_custom_call.1} parent=1 // pred_check_branch
      %40 = sbr.rel (0) target = $region17
    $region16: #{tpu_custom_call.1} parent=1 // pred_region
      %s42 = ssub.s32 2048, 2048
      %43 = vsyncadd [#allocation14], %s42
      %s44 = sshll.u32 [#allocation15], 4
      %s45 = int_to_ptr.vmem [resolvable:$true] %s44
      %50 = dma.hbm_to_vmem [thread:$0]  %s3, 2048, %s45, [#allocation14], 128, 128, 8
    $region17: #{tpu_custom_call.1} parent=1 // pred_fallthru
      _
    // Predicated region
    $region18: #{tpu_custom_call.1} parent=1 // pred_check
      _
    $region19: #{tpu_custom_call.1} parent=1 // pred_check_branch
      %52 = sbr.rel (0) target = $region21
    $region20: #{tpu_custom_call.1} parent=1 // pred_region
      %53 = dma.done [#allocation11], 1024
    $region21: #{tpu_custom_call.1} parent=1 // pred_fallthru
      _
    // Predicated region
    $region22: #{tpu_custom_call.1} parent=1 // pred_check
      _
    $region23: #{tpu_custom_call.1} parent=1 // pred_check_branch
      %55 = sbr.rel (0) target = $region25
    $region24: #{tpu_custom_call.1} parent=1 // pred_region
      %56 = dma.done [#allocation14], 1024
    $region25: #{tpu_custom_call.1} parent=1 // pred_fallthru
      _
    // Predicated region
    $region26: #{tpu_custom_call.1} parent=1 // pred_check
      _
    $region27: #{tpu_custom_call.1} parent=1 // pred_check_branch
      %58 = sbr.rel (0) target = $region29
    $region28: #{tpu_custom_call.1} parent=1 // pred_region
      %59 = dma.done [#allocation14], 2048
    $region29: #{tpu_custom_call.1} parent=1 // pred_fallthru
      _
    %p61 = scmp.eq.s32.totalorder 0, 0
    // Predicated region
    $region30: #{tpu_custom_call.1} parent=1 // pred_check
      %p62 = pneg %p61
    $region31: #{tpu_custom_call.1} parent=1 // pred_check_branch
      %64 = sbr.rel (%p62) target = $region33
    $region32: #{tpu_custom_call.1} parent=1 // pred_region
      %65 = vst [vmem:[#allocation2] sm:$0x1] 0.0
      %vm66 = vcmask 0
      %67 = vst.msk [vmem:[#allocation3] sm:$0x1] %vm66, 0.0
      %68 = vst.msk [vmem:[#allocation4] sm:$0x1] %vm66, 0.0
      %69 = vst.msk [vmem:[#allocation5] sm:$0x1] %vm66, 0.0
      %70 = vst.msk [vmem:[#allocation6] sm:$0x1] %vm66, 0.0
      %71 = vst.msk [vmem:[#allocation7] sm:$0x1] %vm66, 0.0
      %72 = vst.msk [vmem:[#allocation8] sm:$0x1] %vm66, 0.0
    $region33: #{tpu_custom_call.1} parent=1 // pred_fallthru
      _
    %s73 = sld [smem:[#allocation9]]
    %s74 = smul.u32 0, 128
    %s75 = sshra.s32 %s74, 3
    %s76 = sand.u32 %s74, 7
    %s77 = smul.addr %s75, 4
    %s78 = scalar_lea.vmem [#allocation10], %s77
    %v79 = vld [vmem:[%s78] sm:$0xf]
    %v80 = vld [vmem:[%s78 + $0x4] sm:$0xf]
    %v81 = vld [vmem:[%s78 + $0x8] sm:$0xf]
    %v82 = vld [vmem:[%s78 + $0xc] sm:$0xf]
    %v83 = vld [vmem:[%s78 + $0x10] sm:$0xf]
    %v84 = vld [vmem:[%s78 + $0x14] sm:$0xf]
    %v85 = vld [vmem:[%s78 + $0x18] sm:$0xf]
    %v86 = vld [vmem:[%s78 + $0x1c] sm:$0xf]
    %v87 = vld [vmem:[%s78 + $0x20] sm:$0xf]
    %v88 = vld [vmem:[%s78 + $0x24] sm:$0xf]
    %v89 = vld [vmem:[%s78 + $0x28] sm:$0xf]
    %v90 = vld [vmem:[%s78 + $0x2c] sm:$0xf]
    %v91 = vld [vmem:[%s78 + $0x30] sm:$0xf]
    %v92 = vld [vmem:[%s78 + $0x34] sm:$0xf]
    %v93 = vld [vmem:[%s78 + $0x38] sm:$0xf]
    %v94 = vld [vmem:[%s78 + $0x3c] sm:$0xf]
    %s95 = smul.addr %s75, 4
    %s96 = scalar_lea.vmem [#allocation13], %s95
    %v97 = vld [vmem:[%s96] sm:$0xf]
    %v98 = vld [vmem:[%s96 + $0x4] sm:$0xf]
    %v99 = vld [vmem:[%s96 + $0x8] sm:$0xf]
    %v100 = vld [vmem:[%s96 + $0xc] sm:$0xf]
    %v101 = vld [vmem:[%s96 + $0x10] sm:$0xf]
    %v102 = vld [vmem:[%s96 + $0x14] sm:$0xf]
    %v103 = vld [vmem:[%s96 + $0x18] sm:$0xf]
    %v104 = vld [vmem:[%s96 + $0x1c] sm:$0xf]
    %v105 = vld [vmem:[%s96 + $0x20] sm:$0xf]
    %v106 = vld [vmem:[%s96 + $0x24] sm:$0xf]
    %v107 = vld [vmem:[%s96 + $0x28] sm:$0xf]
    %v108 = vld [vmem:[%s96 + $0x2c] sm:$0xf]
    %v109 = vld [vmem:[%s96 + $0x30] sm:$0xf]
    %v110 = vld [vmem:[%s96 + $0x34] sm:$0xf]
    %v111 = vld [vmem:[%s96 + $0x38] sm:$0xf]
    %v112 = vld [vmem:[%s96 + $0x3c] sm:$0xf]
    %v113 = vld [vmem:[#allocation10] sm:$0xf]
    %v114 = vld [vmem:[#allocation10 + $0x4] sm:$0xf]
    %v115 = vld [vmem:[#allocation10 + $0x8] sm:$0xf]
    %v116 = vld [vmem:[#allocation10 + $0xc] sm:$0xf]
    %v117 = vld [vmem:[#allocation10 + $0x10] sm:$0xf]
    %v118 = vld [vmem:[#allocation10 + $0x14] sm:$0xf]
    %v119 = vld [vmem:[#allocation10 + $0x18] sm:$0xf]
    %v120 = vld [vmem:[#allocation10 + $0x1c] sm:$0xf]
    %v121 = vld [vmem:[#allocation10 + $0x20] sm:$0xf]
    %v122 = vld [vmem:[#allocation10 + $0x24] sm:$0xf]
    %v123 = vld [vmem:[#allocation10 + $0x28] sm:$0xf]
    %v124 = vld [vmem:[#allocation10 + $0x2c] sm:$0xf]
    %v125 = vld [vmem:[#allocation10 + $0x30] sm:$0xf]
    %v126 = vld [vmem:[#allocation10 + $0x34] sm:$0xf]
    %v127 = vld [vmem:[#allocation10 + $0x38] sm:$0xf]
    %v128 = vld [vmem:[#allocation10 + $0x3c] sm:$0xf]
    %v129 = vld [vmem:[#allocation13] sm:$0xf]
    %v130 = vld [vmem:[#allocation13 + $0x4] sm:$0xf]
    %v131 = vld [vmem:[#allocation13 + $0x8] sm:$0xf]
    %v132 = vld [vmem:[#allocation13 + $0xc] sm:$0xf]
    %v133 = vld [vmem:[#allocation13 + $0x10] sm:$0xf]
    %v134 = vld [vmem:[#allocation13 + $0x14] sm:$0xf]
    %v135 = vld [vmem:[#allocation13 + $0x18] sm:$0xf]
    %v136 = vld [vmem:[#allocation13 + $0x1c] sm:$0xf]
    %v137 = vld [vmem:[#allocation13 + $0x20] sm:$0xf]
    %v138 = vld [vmem:[#allocation13 + $0x24] sm:$0xf]
    %v139 = vld [vmem:[#allocation13 + $0x28] sm:$0xf]
    %v140 = vld [vmem:[#allocation13 + $0x2c] sm:$0xf]
    %v141 = vld [vmem:[#allocation13 + $0x30] sm:$0xf]
    %v142 = vld [vmem:[#allocation13 + $0x34] sm:$0xf]
    %v143 = vld [vmem:[#allocation13 + $0x38] sm:$0xf]
    %v144 = vld [vmem:[#allocation13 + $0x3c] sm:$0xf]
    %v145 = vlaneseq
    %v146 = vand.u32 %v145, 127
    %v147 = vlaneseq
    %v148 = vshrl.u32 %v147, 7
    %v149 = vadd.s32 %v148, 8
    %v150 = vadd.s32 %v148, 16
    %v151 = vadd.s32 %v148, 24
    %v152 = vadd.s32 %v148, 32
    %v153 = vadd.s32 %v148, 40
    %v154 = vadd.s32 %v148, 48
    %v155 = vadd.s32 %v148, 56
    %v156 = vadd.s32 %v148, 64
    %v157 = vadd.s32 %v148, 72
    %v158 = vadd.s32 %v148, 80
    %v159 = vadd.s32 %v148, 88
    %v160 = vadd.s32 %v148, 96
    %v161 = vadd.s32 %v148, 104
    %v162 = vadd.s32 %v148, 112
    %v163 = vadd.s32 %v148, 120
    %v164 = vstv %s74
    %v165 = vadd.s32 %v148, %v164
    %v166 = vadd.s32 %v149, %v164
    %v167 = vadd.s32 %v150, %v164
    %v168 = vadd.s32 %v151, %v164
    %v169 = vadd.s32 %v152, %v164
    %v170 = vadd.s32 %v153, %v164
    %v171 = vadd.s32 %v154, %v164
    %v172 = vadd.s32 %v155, %v164
    %v173 = vadd.s32 %v156, %v164
    %v174 = vadd.s32 %v157, %v164
    %v175 = vadd.s32 %v158, %v164
    %v176 = vadd.s32 %v159, %v164
    %v177 = vadd.s32 %v160, %v164
    %v178 = vadd.s32 %v161, %v164
    %v179 = vadd.s32 %v162, %v164
    %v180 = vadd.s32 %v163, %v164
    %vm181 = vcmp.eq.s32.totalorder %v146, %v165
    %vm182 = vcmp.eq.s32.totalorder %v146, %v166
    %vm183 = vcmp.eq.s32.totalorder %v146, %v167
    %vm184 = vcmp.eq.s32.totalorder %v146, %v168
    %vm185 = vcmp.eq.s32.totalorder %v146, %v169
    %vm186 = vcmp.eq.s32.totalorder %v146, %v170
    %vm187 = vcmp.eq.s32.totalorder %v146, %v171
    %vm188 = vcmp.eq.s32.totalorder %v146, %v172
    %vm189 = vcmp.eq.s32.totalorder %v146, %v173
    %vm190 = vcmp.eq.s32.totalorder %v146, %v174
    %vm191 = vcmp.eq.s32.totalorder %v146, %v175
    %vm192 = vcmp.eq.s32.totalorder %v146, %v176
    %vm193 = vcmp.eq.s32.totalorder %v146, %v177
    %vm194 = vcmp.eq.s32.totalorder %v146, %v178
    %vm195 = vcmp.eq.s32.totalorder %v146, %v179
    %vm196 = vcmp.eq.s32.totalorder %v146, %v180
    %vm197 = vcmp.lt.s32.totalorder %v146, 8
    %v198 = vsel %vm197, 1, 0
    %v199 = vcvt.s32.f32 %v198
    %vm200 = vcmp.lt.s32.totalorder %v165, 8
    %vm201 = vcmp.lt.s32.totalorder %v166, 8
    %vm202 = vcmp.lt.s32.totalorder %v167, 8
    %vm203 = vcmp.lt.s32.totalorder %v168, 8
    %vm204 = vcmp.lt.s32.totalorder %v169, 8
    %vm205 = vcmp.lt.s32.totalorder %v170, 8
    %vm206 = vcmp.lt.s32.totalorder %v171, 8
    %vm207 = vcmp.lt.s32.totalorder %v172, 8
    %vm208 = vcmp.lt.s32.totalorder %v173, 8
    %vm209 = vcmp.lt.s32.totalorder %v174, 8
    %vm210 = vcmp.lt.s32.totalorder %v175, 8
    %vm211 = vcmp.lt.s32.totalorder %v176, 8
    %vm212 = vcmp.lt.s32.totalorder %v177, 8
    %vm213 = vcmp.lt.s32.totalorder %v178, 8
    %vm214 = vcmp.lt.s32.totalorder %v179, 8
    %vm215 = vcmp.lt.s32.totalorder %v180, 8
    %v216 = vsel %vm200, 1, 0
    %v217 = vsel %vm201, 1, 0
    %v218 = vsel %vm202, 1, 0
    %v219 = vsel %vm203, 1, 0
    %v220 = vsel %vm204, 1, 0
    %v221 = vsel %vm205, 1, 0
    %v222 = vsel %vm206, 1, 0
    %v223 = vsel %vm207, 1, 0
    %v224 = vsel %vm208, 1, 0
    %v225 = vsel %vm209, 1, 0
    %v226 = vsel %vm210, 1, 0
    %v227 = vsel %vm211, 1, 0
    %v228 = vsel %vm212, 1, 0
    %v229 = vsel %vm213, 1, 0
    %v230 = vsel %vm214, 1, 0
    %v231 = vsel %vm215, 1, 0
    %v232 = vcvt.s32.f32 %v216
    %v233 = vcvt.s32.f32 %v217
    %v234 = vcvt.s32.f32 %v218
    %v235 = vcvt.s32.f32 %v219
    %v236 = vcvt.s32.f32 %v220
    %v237 = vcvt.s32.f32 %v221
    %v238 = vcvt.s32.f32 %v222
    %v239 = vcvt.s32.f32 %v223
    %v240 = vcvt.s32.f32 %v224
    %v241 = vcvt.s32.f32 %v225
    %v242 = vcvt.s32.f32 %v226
    %v243 = vcvt.s32.f32 %v227
    %v244 = vcvt.s32.f32 %v228
    %v245 = vcvt.s32.f32 %v229
    %v246 = vcvt.s32.f32 %v230
    %v247 = vcvt.s32.f32 %v231
    %v264 = vunpack.c.l.b16 %v79
    %v265 = vunpack.c.l.b16 %v80
    %v266 = vunpack.c.l.b16 %v81
    %v267 = vunpack.c.l.b16 %v82
    %v268 = vunpack.c.l.b16 %v83
    %v269 = vunpack.c.l.b16 %v84
    %v270 = vunpack.c.l.b16 %v85
    %v271 = vunpack.c.l.b16 %v86
    %v272 = vunpack.c.l.b16 %v87
    %v273 = vunpack.c.l.b16 %v88
    %v274 = vunpack.c.l.b16 %v89
    %v275 = vunpack.c.l.b16 %v90
    %v276 = vunpack.c.l.b16 %v91
    %v277 = vunpack.c.l.b16 %v92
    %v278 = vunpack.c.l.b16 %v93
    %v279 = vunpack.c.l.b16 %v94
    %v280 = vpack.c.b16 %v265, %v264
    %v281 = vpack.c.b16 %v267, %v266
    %v282 = vpack.c.b16 %v269, %v268
    %v283 = vpack.c.b16 %v271, %v270
    %v284 = vpack.c.b16 %v273, %v272
    %v285 = vpack.c.b16 %v275, %v274
    %v286 = vpack.c.b16 %v277, %v276
    %v287 = vpack.c.b16 %v279, %v278
    %v312 = vunpack.c.l.b16 %v129
    %v313 = vunpack.c.l.b16 %v130
    %v314 = vunpack.c.l.b16 %v131
    %v315 = vunpack.c.l.b16 %v132
    %v316 = vunpack.c.l.b16 %v133
    %v317 = vunpack.c.l.b16 %v134
    %v318 = vunpack.c.l.b16 %v135
    %v319 = vunpack.c.l.b16 %v136
    %v320 = vunpack.c.l.b16 %v137
    %v321 = vunpack.c.l.b16 %v138
    %v322 = vunpack.c.l.b16 %v139
    %v323 = vunpack.c.l.b16 %v140
    %v324 = vunpack.c.l.b16 %v141
    %v325 = vunpack.c.l.b16 %v142
    %v326 = vunpack.c.l.b16 %v143
    %v327 = vunpack.c.l.b16 %v144
    %v328 = vpack.c.b16 %v313, %v312
    %v329 = vpack.c.b16 %v315, %v314
    %v330 = vpack.c.b16 %v317, %v316
    %v331 = vpack.c.b16 %v319, %v318
    %v332 = vpack.c.b16 %v321, %v320
    %v333 = vpack.c.b16 %v323, %v322
    %v334 = vpack.c.b16 %v325, %v324
    %v335 = vpack.c.b16 %v327, %v326
    %344 = vmatprep.subr.bf16.mxu0 0
    %345 = vmatpush1.bf16.xpose.msra.mxu0 %v328
    %346 = vmatprep.subr.bf16.mxu0 0
    %347 = vmatpush1.bf16.xpose.msra.mxu0 %v329
    %348 = vmatprep.subr.bf16.mxu0 0
    %349 = vmatpush1.bf16.xpose.msra.mxu0 %v330
    %350 = vmatprep.subr.bf16.mxu0 0
    %351 = vmatpush1.bf16.xpose.msra.mxu0 %v331
    %352 = vmatprep.subr.bf16.mxu0 0
    %353 = vmatpush1.bf16.xpose.msra.mxu0 %v332
    %354 = vmatprep.subr.bf16.mxu0 0
    %355 = vmatpush1.bf16.xpose.msra.mxu0 %v333
    %356 = vmatprep.subr.bf16.mxu0 0
    %357 = vmatpush1.bf16.xpose.msra.mxu0 %v334
    %358 = vmatprep.subr.bf16.mxu0 0
    %359 = vmatpush1.bf16.xpose.msra.mxu0 %v335
    %360 = vmatprep.subr.bf16.mxu0 0
    %361 = vmatpush1.bf16.xpose.msra.mxu0 0
    %362 = vmatprep.subr.bf16.mxu0 0
    %363 = vmatpush1.bf16.xpose.msra.mxu0 0
    %364 = vmatprep.subr.bf16.mxu0 0
    %365 = vmatpush1.bf16.xpose.msra.mxu0 0
    %366 = vmatprep.subr.bf16.mxu0 0
    %367 = vmatpush1.bf16.xpose.msra.mxu0 0
    %368 = vmatprep.subr.bf16.mxu0 0
    %369 = vmatpush1.bf16.xpose.msra.mxu0 0
    %370 = vmatprep.subr.bf16.mxu0 0
    %371 = vmatpush1.bf16.xpose.msra.mxu0 0
    %372 = vmatprep.subr.bf16.mxu0 0
    %373 = vmatpush1.bf16.xpose.msra.mxu0 0
    %374 = vmatprep.subr.bf16.mxu0 0
    %375 = vmatpush1.bf16.xpose.msra.mxu0 0
    %376 = vmatprep.mubr.bf16.mxu0 0
    %377 = vmatmul.mubr.bf16.gmra.mrb[0].mxu0 %v280
    %v378 = vpop.f32.mrb[0].mxu0
    %v379 = vadd.f32 0.0, %v378
    %v380 = vpop.f32.mrb[0].mxu0
    %v381 = vpop.f32.mrb[0].mxu0
    %v382 = vadd.f32 0.0, %v381
    %v383 = vpop.f32.mrb[0].mxu0
    %384 = vmatprep.mubr.bf16.mxu0 0
    %385 = vmatmul.mubr.bf16.gmra.mrb[0].mxu0 %v281
    %v386 = vpop.f32.mrb[0].mxu0
    %v387 = vadd.f32 0.0, %v386
    %v388 = vpop.f32.mrb[0].mxu0
    %v389 = vpop.f32.mrb[0].mxu0
    %v390 = vadd.f32 0.0, %v389
    %v391 = vpop.f32.mrb[0].mxu0
    %392 = vmatprep.mubr.bf16.mxu0 0
    %393 = vmatmul.mubr.bf16.gmra.mrb[0].mxu0 %v282
    %v394 = vpop.f32.mrb[0].mxu0
    %v395 = vadd.f32 0.0, %v394
    %v396 = vpop.f32.mrb[0].mxu0
    %v397 = vpop.f32.mrb[0].mxu0
    %v398 = vadd.f32 0.0, %v397
    %v399 = vpop.f32.mrb[0].mxu0
    %400 = vmatprep.mubr.bf16.mxu0 0
    %401 = vmatmul.mubr.bf16.gmra.mrb[0].mxu0 %v283
    %v402 = vpop.f32.mrb[0].mxu0
    %v403 = vadd.f32 0.0, %v402
    %v404 = vpop.f32.mrb[0].mxu0
    %v405 = vpop.f32.mrb[0].mxu0
    %v406 = vadd.f32 0.0, %v405
    %v407 = vpop.f32.mrb[0].mxu0
    %408 = vmatprep.mubr.bf16.mxu0 0
    %409 = vmatmul.mubr.bf16.gmra.mrb[0].mxu0 %v284
    %v410 = vpop.f32.mrb[0].mxu0
    %v411 = vadd.f32 0.0, %v410
    %v412 = vpop.f32.mrb[0].mxu0
    %v413 = vpop.f32.mrb[0].mxu0
    %v414 = vadd.f32 0.0, %v413
    %v415 = vpop.f32.mrb[0].mxu0
    %416 = vmatprep.mubr.bf16.mxu0 0
    %417 = vmatmul.mubr.bf16.gmra.mrb[0].mxu0 %v285
    %v418 = vpop.f32.mrb[0].mxu0
    %v419 = vadd.f32 0.0, %v418
    %v420 = vpop.f32.mrb[0].mxu0
    %v421 = vpop.f32.mrb[0].mxu0
    %v422 = vadd.f32 0.0, %v421
    %v423 = vpop.f32.mrb[0].mxu0
    %424 = vmatprep.mubr.bf16.mxu0 0
    %425 = vmatmul.mubr.bf16.gmra.mrb[0].mxu0 %v286
    %v426 = vpop.f32.mrb[0].mxu0
    %v427 = vadd.f32 0.0, %v426
    %v428 = vpop.f32.mrb[0].mxu0
    %v429 = vpop.f32.mrb[0].mxu0
    %v430 = vadd.f32 0.0, %v429
    %v431 = vpop.f32.mrb[0].mxu0
    %432 = vmatprep.mubr.bf16.mxu0 0
    %433 = vmatmul.mubr.bf16.gmra.mrb[0].mxu0 %v287
    %v434 = vpop.f32.mrb[0].mxu0
    %v435 = vadd.f32 0.0, %v434
    %v436 = vpop.f32.mrb[0].mxu0
    %v437 = vpop.f32.mrb[0].mxu0
    %v438 = vadd.f32 0.0, %v437
    %v439 = vpop.f32.mrb[0].mxu0
    %440 = vdwg.mxu0
    %v441 = vstv %s73
    %v442 = vsub.f32 %v379, %v441
    %v443 = vsub.f32 %v382, %v441
    %v444 = vsub.f32 %v387, %v441
    %v445 = vsub.f32 %v390, %v441
    %v446 = vsub.f32 %v395, %v441
    %v447 = vsub.f32 %v398, %v441
    %v448 = vsub.f32 %v403, %v441
    %v449 = vsub.f32 %v406, %v441
    %v450 = vsub.f32 %v411, %v441
    %v451 = vsub.f32 %v414, %v441
    %v452 = vsub.f32 %v419, %v441
    %v453 = vsub.f32 %v422, %v441
    %v454 = vsub.f32 %v427, %v441
    %v455 = vsub.f32 %v430, %v441
    %v456 = vsub.f32 %v435, %v441
    %v457 = vsub.f32 %v438, %v441
    %v458 = vmul.f32 %v442, 1.442695
    %v459 = vpow.pop %v458
    %v460 = vmul.f32 %v443, 1.442695
    %v461 = vpow.pop %v460
    %v462 = vmul.f32 %v444, 1.442695
    %v463 = vpow.pop %v462
    %v464 = vmul.f32 %v445, 1.442695
    %v465 = vpow.pop %v464
    %v466 = vmul.f32 %v446, 1.442695
    %v467 = vpow.pop %v466
    %v468 = vmul.f32 %v447, 1.442695
    %v469 = vpow.pop %v468
    %v470 = vmul.f32 %v448, 1.442695
    %v471 = vpow.pop %v470
    %v472 = vmul.f32 %v449, 1.442695
    %v473 = vpow.pop %v472
    %v474 = vmul.f32 %v450, 1.442695
    %v475 = vpow.pop %v474
    %v476 = vmul.f32 %v451, 1.442695
    %v477 = vpow.pop %v476
    %v478 = vmul.f32 %v452, 1.442695
    %v479 = vpow.pop %v478
    %v480 = vmul.f32 %v453, 1.442695
    %v481 = vpow.pop %v480
    %v482 = vmul.f32 %v454, 1.442695
    %v483 = vpow.pop %v482
    %v484 = vmul.f32 %v455, 1.442695
    %v485 = vpow.pop %v484
    %v486 = vmul.f32 %v456, 1.442695
    %v487 = vpow.pop %v486
    %v488 = vmul.f32 %v457, 1.442695
    %v489 = vpow.pop %v488
    %v506 = vunpack.c.l.b16 %v113
    %v507 = vunpack.c.l.b16 %v114
    %v508 = vunpack.c.l.b16 %v115
    %v509 = vunpack.c.l.b16 %v116
    %v510 = vunpack.c.l.b16 %v117
    %v511 = vunpack.c.l.b16 %v118
    %v512 = vunpack.c.l.b16 %v119
    %v513 = vunpack.c.l.b16 %v120
    %v514 = vunpack.c.l.b16 %v121
    %v515 = vunpack.c.l.b16 %v122
    %v516 = vunpack.c.l.b16 %v123
    %v517 = vunpack.c.l.b16 %v124
    %v518 = vunpack.c.l.b16 %v125
    %v519 = vunpack.c.l.b16 %v126
    %v520 = vunpack.c.l.b16 %v127
    %v521 = vunpack.c.l.b16 %v128
    %v522 = vpack.c.b16 %v507, %v506
    %v523 = vpack.c.b16 %v509, %v508
    %v524 = vpack.c.b16 %v511, %v510
    %v525 = vpack.c.b16 %v513, %v512
    %v526 = vpack.c.b16 %v515, %v514
    %v527 = vpack.c.b16 %v517, %v516
    %v528 = vpack.c.b16 %v519, %v518
    %v529 = vpack.c.b16 %v521, %v520
    %538 = vmatprep.subr.bf16.mxu0 0
    %539 = vmatpush1.bf16.xpose.msra.mxu0 %v522
    %540 = vmatprep.subr.bf16.mxu0 0
    %541 = vmatpush1.bf16.xpose.msra.mxu0 %v523
    %542 = vmatprep.subr.bf16.mxu0 0
    %543 = vmatpush1.bf16.xpose.msra.mxu0 %v524
    %544 = vmatprep.subr.bf16.mxu0 0
    %545 = vmatpush1.bf16.xpose.msra.mxu0 %v525
    %546 = vmatprep.subr.bf16.mxu0 0
    %547 = vmatpush1.bf16.xpose.msra.mxu0 %v526
    %548 = vmatprep.subr.bf16.mxu0 0
    %549 = vmatpush1.bf16.xpose.msra.mxu0 %v527
    %550 = vmatprep.subr.bf16.mxu0 0
    %551 = vmatpush1.bf16.xpose.msra.mxu0 %v528
    %552 = vmatprep.subr.bf16.mxu0 0
    %553 = vmatpush1.bf16.xpose.msra.mxu0 %v529
    %554 = vmatprep.subr.bf16.mxu0 0
    %555 = vmatpush1.bf16.xpose.msra.mxu0 0
    %556 = vmatprep.subr.bf16.mxu0 0
    %557 = vmatpush1.bf16.xpose.msra.mxu0 0
    %558 = vmatprep.subr.bf16.mxu0 0
    %559 = vmatpush1.bf16.xpose.msra.mxu0 0
    %560 = vmatprep.subr.bf16.mxu0 0
    %561 = vmatpush1.bf16.xpose.msra.mxu0 0
    %562 = vmatprep.subr.bf16.mxu0 0
    %563 = vmatpush1.bf16.xpose.msra.mxu0 0
    %564 = vmatprep.subr.bf16.mxu0 0
    %565 = vmatpush1.bf16.xpose.msra.mxu0 0
    %566 = vmatprep.subr.bf16.mxu0 0
    %567 = vmatpush1.bf16.xpose.msra.mxu0 0
    %568 = vmatprep.subr.bf16.mxu0 0
    %569 = vmatpush1.bf16.xpose.msra.mxu0 0
    %570 = vmatprep.mubr.bf16.mxu0 0
    %571 = vmatmul.mubr.bf16.gmra.mrb[0].mxu0 %v280
    %v572 = vpop.f32.mrb[0].mxu0
    %v573 = vadd.f32 0.0, %v572
    %v574 = vpop.f32.mrb[0].mxu0
    %v575 = vpop.f32.mrb[0].mxu0
    %v576 = vadd.f32 0.0, %v575
    %v577 = vpop.f32.mrb[0].mxu0
    %578 = vmatprep.mubr.bf16.mxu0 0
    %579 = vmatmul.mubr.bf16.gmra.mrb[0].mxu0 %v281
    %v580 = vpop.f32.mrb[0].mxu0
    %v581 = vadd.f32 0.0, %v580
    %v582 = vpop.f32.mrb[0].mxu0
    %v583 = vpop.f32.mrb[0].mxu0
    %v584 = vadd.f32 0.0, %v583
    %v585 = vpop.f32.mrb[0].mxu0
    %586 = vmatprep.mubr.bf16.mxu0 0
    %587 = vmatmul.mubr.bf16.gmra.mrb[0].mxu0 %v282
    %v588 = vpop.f32.mrb[0].mxu0
    %v589 = vadd.f32 0.0, %v588
    %v590 = vpop.f32.mrb[0].mxu0
    %v591 = vpop.f32.mrb[0].mxu0
    %v592 = vadd.f32 0.0, %v591
    %v593 = vpop.f32.mrb[0].mxu0
    %594 = vmatprep.mubr.bf16.mxu0 0
    %595 = vmatmul.mubr.bf16.gmra.mrb[0].mxu0 %v283
    %v596 = vpop.f32.mrb[0].mxu0
    %v597 = vadd.f32 0.0, %v596
    %v598 = vpop.f32.mrb[0].mxu0
    %v599 = vpop.f32.mrb[0].mxu0
    %v600 = vadd.f32 0.0, %v599
    %v601 = vpop.f32.mrb[0].mxu0
    %602 = vmatprep.mubr.bf16.mxu0 0
    %603 = vmatmul.mubr.bf16.gmra.mrb[0].mxu0 %v284
    %v604 = vpop.f32.mrb[0].mxu0
    %v605 = vadd.f32 0.0, %v604
    %v606 = vpop.f32.mrb[0].mxu0
    %v607 = vpop.f32.mrb[0].mxu0
    %v608 = vadd.f32 0.0, %v607
    %v609 = vpop.f32.mrb[0].mxu0
    %610 = vmatprep.mubr.bf16.mxu0 0
    %611 = vmatmul.mubr.bf16.gmra.mrb[0].mxu0 %v285
    %v612 = vpop.f32.mrb[0].mxu0
    %v613 = vadd.f32 0.0, %v612
    %v614 = vpop.f32.mrb[0].mxu0
    %v615 = vpop.f32.mrb[0].mxu0
    %v616 = vadd.f32 0.0, %v615
    %v617 = vpop.f32.mrb[0].mxu0
    %618 = vmatprep.mubr.bf16.mxu0 0
    %619 = vmatmul.mubr.bf16.gmra.mrb[0].mxu0 %v286
    %v620 = vpop.f32.mrb[0].mxu0
    %v621 = vadd.f32 0.0, %v620
    %v622 = vpop.f32.mrb[0].mxu0
    %v623 = vpop.f32.mrb[0].mxu0
    %v624 = vadd.f32 0.0, %v623
    %v625 = vpop.f32.mrb[0].mxu0
    %626 = vmatprep.mubr.bf16.mxu0 0
    %627 = vmatmul.mubr.bf16.gmra.mrb[0].mxu0 %v287
    %v628 = vpop.f32.mrb[0].mxu0
    %v629 = vadd.f32 0.0, %v628
    %v630 = vpop.f32.mrb[0].mxu0
    %v631 = vpop.f32.mrb[0].mxu0
    %v632 = vadd.f32 0.0, %v631
    %v633 = vpop.f32.mrb[0].mxu0
    %634 = vdwg.mxu0
    %v635 = vsub.f32 %v573, %v441
    %v636 = vsub.f32 %v576, %v441
    %v637 = vsub.f32 %v581, %v441
    %v638 = vsub.f32 %v584, %v441
    %v639 = vsub.f32 %v589, %v441
    %v640 = vsub.f32 %v592, %v441
    %v641 = vsub.f32 %v597, %v441
    %v642 = vsub.f32 %v600, %v441
    %v643 = vsub.f32 %v605, %v441
    %v644 = vsub.f32 %v608, %v441
    %v645 = vsub.f32 %v613, %v441
    %v646 = vsub.f32 %v616, %v441
    %v647 = vsub.f32 %v621, %v441
    %v648 = vsub.f32 %v624, %v441
    %v649 = vsub.f32 %v629, %v441
    %v650 = vsub.f32 %v632, %v441
    %v651 = vmul.f32 %v635, 1.442695
    %v652 = vpow.pop %v651
    %v653 = vmul.f32 %v636, 1.442695
    %v654 = vpow.pop %v653
    %v655 = vmul.f32 %v637, 1.442695
    %v656 = vpow.pop %v655
    %v657 = vmul.f32 %v638, 1.442695
    %v658 = vpow.pop %v657
    %v659 = vmul.f32 %v639, 1.442695
    %v660 = vpow.pop %v659
    %v661 = vmul.f32 %v640, 1.442695
    %v662 = vpow.pop %v661
    %v663 = vmul.f32 %v641, 1.442695
    %v664 = vpow.pop %v663
    %v665 = vmul.f32 %v642, 1.442695
    %v666 = vpow.pop %v665
    %v667 = vmul.f32 %v643, 1.442695
    %v668 = vpow.pop %v667
    %v669 = vmul.f32 %v644, 1.442695
    %v670 = vpow.pop %v669
    %v671 = vmul.f32 %v645, 1.442695
    %v672 = vpow.pop %v671
    %v673 = vmul.f32 %v646, 1.442695
    %v674 = vpow.pop %v673
    %v675 = vmul.f32 %v647, 1.442695
    %v676 = vpow.pop %v675
    %v677 = vmul.f32 %v648, 1.442695
    %v678 = vpow.pop %v677
    %v679 = vmul.f32 %v649, 1.442695
    %v680 = vpow.pop %v679
    %v681 = vmul.f32 %v650, 1.442695
    %v682 = vpow.pop %v681
    %v683 = vsel %vm181, 0.0, %v652
    %v684 = vsel %vm182, 0.0, %v654
    %v685 = vsel %vm183, 0.0, %v656
    %v686 = vsel %vm184, 0.0, %v658
    %v687 = vsel %vm185, 0.0, %v660
    %v688 = vsel %vm186, 0.0, %v662
    %v689 = vsel %vm187, 0.0, %v664
    %v690 = vsel %vm188, 0.0, %v666
    %v691 = vsel %vm189, 0.0, %v668
    %v692 = vsel %vm190, 0.0, %v670
    %v693 = vsel %vm191, 0.0, %v672
    %v694 = vsel %vm192, 0.0, %v674
    %v695 = vsel %vm193, 0.0, %v676
    %v696 = vsel %vm194, 0.0, %v678
    %v697 = vsel %vm195, 0.0, %v680
    %v698 = vsel %vm196, 0.0, %v682
    %v699 = vadd.f32 %v459, %v683
    %v700 = vadd.f32 %v461, %v684
    %v701 = vadd.f32 %v463, %v685
    %v702 = vadd.f32 %v465, %v686
    %v703 = vadd.f32 %v467, %v687
    %v704 = vadd.f32 %v469, %v688
    %v705 = vadd.f32 %v471, %v689
    %v706 = vadd.f32 %v473, %v690
    %v707 = vadd.f32 %v475, %v691
    %v708 = vadd.f32 %v477, %v692
    %v709 = vadd.f32 %v479, %v693
    %v710 = vadd.f32 %v481, %v694
    %v711 = vadd.f32 %v483, %v695
    %v712 = vadd.f32 %v485, %v696
    %v713 = vadd.f32 %v487, %v697
    %v714 = vadd.f32 %v489, %v698
    %v715 = vmul.f32 %v699, %v199
    %v716 = vmul.f32 %v700, %v199
    %v717 = vmul.f32 %v701, %v199
    %v718 = vmul.f32 %v702, %v199
    %v719 = vmul.f32 %v703, %v199
    %v720 = vmul.f32 %v704, %v199
    %v721 = vmul.f32 %v705, %v199
    %v722 = vmul.f32 %v706, %v199
    %v723 = vmul.f32 %v707, %v199
    %v724 = vmul.f32 %v708, %v199
    %v725 = vmul.f32 %v709, %v199
    %v726 = vmul.f32 %v710, %v199
    %v727 = vmul.f32 %v711, %v199
    %v728 = vmul.f32 %v712, %v199
    %v729 = vmul.f32 %v713, %v199
    %v730 = vmul.f32 %v714, %v199
    %731 = vadd.xlane.f32.xlu0 %v715
    %v732 = vpop.xlane.xlu0 %731
    %733 = vadd.xlane.f32.xlu0 %v716
    %v734 = vpop.xlane.xlu0 %733
    %735 = vadd.xlane.f32.xlu0 %v717
    %v736 = vpop.xlane.xlu0 %735
    %737 = vadd.xlane.f32.xlu0 %v718
    %v738 = vpop.xlane.xlu0 %737
    %739 = vadd.xlane.f32.xlu0 %v719
    %v740 = vpop.xlane.xlu0 %739
    %741 = vadd.xlane.f32.xlu0 %v720
    %v742 = vpop.xlane.xlu0 %741
    %743 = vadd.xlane.f32.xlu0 %v721
    %v744 = vpop.xlane.xlu0 %743
    %745 = vadd.xlane.f32.xlu0 %v722
    %v746 = vpop.xlane.xlu0 %745
    %747 = vadd.xlane.f32.xlu0 %v723
    %v748 = vpop.xlane.xlu0 %747
    %749 = vadd.xlane.f32.xlu0 %v724
    %v750 = vpop.xlane.xlu0 %749
    %751 = vadd.xlane.f32.xlu0 %v725
    %v752 = vpop.xlane.xlu0 %751
    %753 = vadd.xlane.f32.xlu0 %v726
    %v754 = vpop.xlane.xlu0 %753
    %755 = vadd.xlane.f32.xlu0 %v727
    %v756 = vpop.xlane.xlu0 %755
    %757 = vadd.xlane.f32.xlu0 %v728
    %v758 = vpop.xlane.xlu0 %757
    %759 = vadd.xlane.f32.xlu0 %v729
    %v760 = vpop.xlane.xlu0 %759
    %761 = vadd.xlane.f32.xlu0 %v730
    %v762 = vpop.xlane.xlu0 %761
    %v763 = vmax.f32 %v732, 1e-37
    %v764 = vmax.f32 %v734, 1e-37
    %v765 = vmax.f32 %v736, 1e-37
    %v766 = vmax.f32 %v738, 1e-37
    %v767 = vmax.f32 %v740, 1e-37
    %v768 = vmax.f32 %v742, 1e-37
    %v769 = vmax.f32 %v744, 1e-37
    %v770 = vmax.f32 %v746, 1e-37
    %v771 = vmax.f32 %v748, 1e-37
    %v772 = vmax.f32 %v750, 1e-37
    %v773 = vmax.f32 %v752, 1e-37
    %v774 = vmax.f32 %v754, 1e-37
    %v775 = vmax.f32 %v756, 1e-37
    %v776 = vmax.f32 %v758, 1e-37
    %v777 = vmax.f32 %v760, 1e-37
    %v778 = vmax.f32 %v762, 1e-37
    %v779 = vlog2.pop %v763
    %v780 = vmul.f32 %v779, 0.6931472
    %v781 = vlog2.pop %v764
    %v782 = vmul.f32 %v781, 0.6931472
    %v783 = vlog2.pop %v765
    %v784 = vmul.f32 %v783, 0.6931472
    %v785 = vlog2.pop %v766
    %v786 = vmul.f32 %v785, 0.6931472
    %v787 = vlog2.pop %v767
    %v788 = vmul.f32 %v787, 0.6931472
    %v789 = vlog2.pop %v768
    %v790 = vmul.f32 %v789, 0.6931472
    %v791 = vlog2.pop %v769
    %v792 = vmul.f32 %v791, 0.6931472
    %v793 = vlog2.pop %v770
    %v794 = vmul.f32 %v793, 0.6931472
    %v795 = vlog2.pop %v771
    %v796 = vmul.f32 %v795, 0.6931472
    %v797 = vlog2.pop %v772
    %v798 = vmul.f32 %v797, 0.6931472
    %v799 = vlog2.pop %v773
    %v800 = vmul.f32 %v799, 0.6931472
    %v801 = vlog2.pop %v774
    %v802 = vmul.f32 %v801, 0.6931472
    %v803 = vlog2.pop %v775
    %v804 = vmul.f32 %v803, 0.6931472
    %v805 = vlog2.pop %v776
    %v806 = vmul.f32 %v805, 0.6931472
    %v807 = vlog2.pop %v777
    %v808 = vmul.f32 %v807, 0.6931472
    %v809 = vlog2.pop %v778
    %v810 = vmul.f32 %v809, 0.6931472
    %v811 = vadd.f32 %v441, %v780
    %v812 = vadd.f32 %v441, %v782
    %v813 = vadd.f32 %v441, %v784
    %v814 = vadd.f32 %v441, %v786
    %v815 = vadd.f32 %v441, %v788
    %v816 = vadd.f32 %v441, %v790
    %v817 = vadd.f32 %v441, %v792
    %v818 = vadd.f32 %v441, %v794
    %v819 = vadd.f32 %v441, %v796
    %v820 = vadd.f32 %v441, %v798
    %v821 = vadd.f32 %v441, %v800
    %v822 = vadd.f32 %v441, %v802
    %v823 = vadd.f32 %v441, %v804
    %v824 = vadd.f32 %v441, %v806
    %v825 = vadd.f32 %v441, %v808
    %v826 = vadd.f32 %v441, %v810
    %v827 = vunpack.c.l.bf16 %v79
    %v828 = vunpack.c.l.bf16 %v80
    %v829 = vunpack.c.l.bf16 %v81
    %v830 = vunpack.c.l.bf16 %v82
    %v831 = vunpack.c.l.bf16 %v83
    %v832 = vunpack.c.l.bf16 %v84
    %v833 = vunpack.c.l.bf16 %v85
    %v834 = vunpack.c.l.bf16 %v86
    %v835 = vunpack.c.l.bf16 %v87
    %v836 = vunpack.c.l.bf16 %v88
    %v837 = vunpack.c.l.bf16 %v89
    %v838 = vunpack.c.l.bf16 %v90
    %v839 = vunpack.c.l.bf16 %v91
    %v840 = vunpack.c.l.bf16 %v92
    %v841 = vunpack.c.l.bf16 %v93
    %v842 = vunpack.c.l.bf16 %v94
    %v843 = vunpack.c.l.bf16 %v97
    %v844 = vunpack.c.l.bf16 %v98
    %v845 = vunpack.c.l.bf16 %v99
    %v846 = vunpack.c.l.bf16 %v100
    %v847 = vunpack.c.l.bf16 %v101
    %v848 = vunpack.c.l.bf16 %v102
    %v849 = vunpack.c.l.bf16 %v103
    %v850 = vunpack.c.l.bf16 %v104
    %v851 = vunpack.c.l.bf16 %v105
    %v852 = vunpack.c.l.bf16 %v106
    %v853 = vunpack.c.l.bf16 %v107
    %v854 = vunpack.c.l.bf16 %v108
    %v855 = vunpack.c.l.bf16 %v109
    %v856 = vunpack.c.l.bf16 %v110
    %v857 = vunpack.c.l.bf16 %v111
    %v858 = vunpack.c.l.bf16 %v112
    %v859 = vmul.f32 %v827, %v843
    %v860 = vmul.f32 %v828, %v844
    %v861 = vmul.f32 %v829, %v845
    %v862 = vmul.f32 %v830, %v846
    %v863 = vmul.f32 %v831, %v847
    %v864 = vmul.f32 %v832, %v848
    %v865 = vmul.f32 %v833, %v849
    %v866 = vmul.f32 %v834, %v850
    %v867 = vmul.f32 %v835, %v851
    %v868 = vmul.f32 %v836, %v852
    %v869 = vmul.f32 %v837, %v853
    %v870 = vmul.f32 %v838, %v854
    %v871 = vmul.f32 %v839, %v855
    %v872 = vmul.f32 %v840, %v856
    %v873 = vmul.f32 %v841, %v857
    %v874 = vmul.f32 %v842, %v858
    %875 = vadd.xlane.f32.xlu0 %v859
    %v876 = vpop.xlane.xlu0 %875
    %877 = vadd.xlane.f32.xlu0 %v860
    %v878 = vpop.xlane.xlu0 %877
    %879 = vadd.xlane.f32.xlu0 %v861
    %v880 = vpop.xlane.xlu0 %879
    %881 = vadd.xlane.f32.xlu0 %v862
    %v882 = vpop.xlane.xlu0 %881
    %883 = vadd.xlane.f32.xlu0 %v863
    %v884 = vpop.xlane.xlu0 %883
    %885 = vadd.xlane.f32.xlu0 %v864
    %v886 = vpop.xlane.xlu0 %885
    %887 = vadd.xlane.f32.xlu0 %v865
    %v888 = vpop.xlane.xlu0 %887
    %889 = vadd.xlane.f32.xlu0 %v866
    %v890 = vpop.xlane.xlu0 %889
    %891 = vadd.xlane.f32.xlu0 %v867
    %v892 = vpop.xlane.xlu0 %891
    %893 = vadd.xlane.f32.xlu0 %v868
    %v894 = vpop.xlane.xlu0 %893
    %895 = vadd.xlane.f32.xlu0 %v869
    %v896 = vpop.xlane.xlu0 %895
    %897 = vadd.xlane.f32.xlu0 %v870
    %v898 = vpop.xlane.xlu0 %897
    %899 = vadd.xlane.f32.xlu0 %v871
    %v900 = vpop.xlane.xlu0 %899
    %901 = vadd.xlane.f32.xlu0 %v872
    %v902 = vpop.xlane.xlu0 %901
    %903 = vadd.xlane.f32.xlu0 %v873
    %v904 = vpop.xlane.xlu0 %903
    %905 = vadd.xlane.f32.xlu0 %v874
    %v906 = vpop.xlane.xlu0 %905
    %v907 = vmul.f32 %v811, %v232
    %v908 = vmul.f32 %v812, %v233
    %v909 = vmul.f32 %v813, %v234
    %v910 = vmul.f32 %v814, %v235
    %v911 = vmul.f32 %v815, %v236
    %v912 = vmul.f32 %v816, %v237
    %v913 = vmul.f32 %v817, %v238
    %v914 = vmul.f32 %v818, %v239
    %v915 = vmul.f32 %v819, %v240
    %v916 = vmul.f32 %v820, %v241
    %v917 = vmul.f32 %v821, %v242
    %v918 = vmul.f32 %v822, %v243
    %v919 = vmul.f32 %v823, %v244
    %v920 = vmul.f32 %v824, %v245
    %v921 = vmul.f32 %v825, %v246
    %v922 = vmul.f32 %v826, %v247
    %v923 = vmul.f32 %v876, %v232
    %v924 = vmul.f32 %v878, %v233
    %v925 = vmul.f32 %v880, %v234
    %v926 = vmul.f32 %v882, %v235
    %v927 = vmul.f32 %v884, %v236
    %v928 = vmul.f32 %v886, %v237
    %v929 = vmul.f32 %v888, %v238
    %v930 = vmul.f32 %v890, %v239
    %v931 = vmul.f32 %v892, %v240
    %v932 = vmul.f32 %v894, %v241
    %v933 = vmul.f32 %v896, %v242
    %v934 = vmul.f32 %v898, %v243
    %v935 = vmul.f32 %v900, %v244
    %v936 = vmul.f32 %v902, %v245
    %v937 = vmul.f32 %v904, %v246
    %v938 = vmul.f32 %v906, %v247
    %v939 = vld [vmem:[#allocation3] sm:$0x1]
    %v940 = vadd.f32 %v907, %v908
    %v941 = vadd.f32 %v940, %v909
    %v942 = vadd.f32 %v941, %v910
    %v943 = vadd.f32 %v942, %v911
    %v944 = vadd.f32 %v943, %v912
    %v945 = vadd.f32 %v944, %v913
    %v946 = vadd.f32 %v945, %v914
    %v947 = vadd.f32 %v946, %v915
    %v948 = vadd.f32 %v947, %v916
    %v949 = vadd.f32 %v948, %v917
    %v950 = vadd.f32 %v949, %v918
    %v951 = vadd.f32 %v950, %v919
    %v952 = vadd.f32 %v951, %v920
    %v953 = vadd.f32 %v952, %v921
    %v954 = vadd.f32 %v953, %v922
    %v955 = vrot.slane %v954, 4
    %v956 = vadd.f32 %v954, %v955
    %v957 = vrot.slane %v956, 2
    %v958 = vadd.f32 %v956, %v957
    %v959 = vrot.slane %v958, 1
    %v960 = vadd.f32 %v958, %v959
    %v961 = vadd.f32 %v939, %v960
    %vm962 = vcmask 0
    %963 = vst.msk [vmem:[#allocation3] sm:$0x1] %vm962, %v961
    %v964 = vld [vmem:[#allocation4] sm:$0x1]
    %v965 = vadd.f32 %v923, %v924
    %v966 = vadd.f32 %v965, %v925
    %v967 = vadd.f32 %v966, %v926
    %v968 = vadd.f32 %v967, %v927
    %v969 = vadd.f32 %v968, %v928
    %v970 = vadd.f32 %v969, %v929
    %v971 = vadd.f32 %v970, %v930
    %v972 = vadd.f32 %v971, %v931
    %v973 = vadd.f32 %v972, %v932
    %v974 = vadd.f32 %v973, %v933
    %v975 = vadd.f32 %v974, %v934
    %v976 = vadd.f32 %v975, %v935
    %v977 = vadd.f32 %v976, %v936
    %v978 = vadd.f32 %v977, %v937
    %v979 = vadd.f32 %v978, %v938
    %v980 = vrot.slane %v979, 4
    %v981 = vadd.f32 %v979, %v980
    %v982 = vrot.slane %v981, 2
    %v983 = vadd.f32 %v981, %v982
    %v984 = vrot.slane %v983, 1
    %v985 = vadd.f32 %v983, %v984
    %v986 = vadd.f32 %v964, %v985
    %987 = vst.msk [vmem:[#allocation4] sm:$0x1] %vm962, %v986
    %v1004 = vunpack.c.l.b16 %v97
    %v1005 = vunpack.c.l.b16 %v98
    %v1006 = vunpack.c.l.b16 %v99
    %v1007 = vunpack.c.l.b16 %v100
    %v1008 = vunpack.c.l.b16 %v101
    %v1009 = vunpack.c.l.b16 %v102
    %v1010 = vunpack.c.l.b16 %v103
    %v1011 = vunpack.c.l.b16 %v104
    %v1012 = vunpack.c.l.b16 %v105
    %v1013 = vunpack.c.l.b16 %v106
    %v1014 = vunpack.c.l.b16 %v107
    %v1015 = vunpack.c.l.b16 %v108
    %v1016 = vunpack.c.l.b16 %v109
    %v1017 = vunpack.c.l.b16 %v110
    %v1018 = vunpack.c.l.b16 %v111
    %v1019 = vunpack.c.l.b16 %v112
    %v1020 = vpack.c.b16 %v1005, %v1004
    %v1021 = vpack.c.b16 %v1007, %v1006
    %v1022 = vpack.c.b16 %v1009, %v1008
    %v1023 = vpack.c.b16 %v1011, %v1010
    %v1024 = vpack.c.b16 %v1013, %v1012
    %v1025 = vpack.c.b16 %v1015, %v1014
    %v1026 = vpack.c.b16 %v1017, %v1016
    %v1027 = vpack.c.b16 %v1019, %v1018
    %1036 = vmatprep.subr.bf16.mxu0 0
    %1037 = vmatpush1.bf16.xpose.msra.mxu0 %v328
    %1038 = vmatprep.subr.bf16.mxu0 0
    %1039 = vmatpush1.bf16.xpose.msra.mxu0 %v329
    %1040 = vmatprep.subr.bf16.mxu0 0
    %1041 = vmatpush1.bf16.xpose.msra.mxu0 %v330
    %1042 = vmatprep.subr.bf16.mxu0 0
    %1043 = vmatpush1.bf16.xpose.msra.mxu0 %v331
    %1044 = vmatprep.subr.bf16.mxu0 0
    %1045 = vmatpush1.bf16.xpose.msra.mxu0 %v332
    %1046 = vmatprep.subr.bf16.mxu0 0
    %1047 = vmatpush1.bf16.xpose.msra.mxu0 %v333
    %1048 = vmatprep.subr.bf16.mxu0 0
    %1049 = vmatpush1.bf16.xpose.msra.mxu0 %v334
    %1050 = vmatprep.subr.bf16.mxu0 0
    %1051 = vmatpush1.bf16.xpose.msra.mxu0 %v335
    %1052 = vmatprep.subr.bf16.mxu0 0
    %1053 = vmatpush1.bf16.xpose.msra.mxu0 0
    %1054 = vmatprep.subr.bf16.mxu0 0
    %1055 = vmatpush1.bf16.xpose.msra.mxu0 0
    %1056 = vmatprep.subr.bf16.mxu0 0
    %1057 = vmatpush1.bf16.xpose.msra.mxu0 0
    %1058 = vmatprep.subr.bf16.mxu0 0
    %1059 = vmatpush1.bf16.xpose.msra.mxu0 0
    %1060 = vmatprep.subr.bf16.mxu0 0
    %1061 = vmatpush1.bf16.xpose.msra.mxu0 0
    %1062 = vmatprep.subr.bf16.mxu0 0
    %1063 = vmatpush1.bf16.xpose.msra.mxu0 0
    %1064 = vmatprep.subr.bf16.mxu0 0
    %1065 = vmatpush1.bf16.xpose.msra.mxu0 0
    %1066 = vmatprep.subr.bf16.mxu0 0
    %1067 = vmatpush1.bf16.xpose.msra.mxu0 0
    %1068 = vmatprep.mubr.bf16.mxu0 0
    %1069 = vmatmul.mubr.bf16.gmra.mrb[0].mxu0 %v1020
    %v1070 = vpop.f32.mrb[0].mxu0
    %v1071 = vadd.f32 0.0, %v1070
    %v1072 = vpop.f32.mrb[0].mxu0
    %v1073 = vpop.f32.mrb[0].mxu0
    %v1074 = vadd.f32 0.0, %v1073
    %v1075 = vpop.f32.mrb[0].mxu0
    %1076 = vmatprep.mubr.bf16.mxu0 0
    %1077 = vmatmul.mubr.bf16.gmra.mrb[0].mxu0 %v1021
    %v1078 = vpop.f32.mrb[0].mxu0
    %v1079 = vadd.f32 0.0, %v1078
    %v1080 = vpop.f32.mrb[0].mxu0
    %v1081 = vpop.f32.mrb[0].mxu0
    %v1082 = vadd.f32 0.0, %v1081
    %v1083 = vpop.f32.mrb[0].mxu0
    %1084 = vmatprep.mubr.bf16.mxu0 0
    %1085 = vmatmul.mubr.bf16.gmra.mrb[0].mxu0 %v1022
    %v1086 = vpop.f32.mrb[0].mxu0
    %v1087 = vadd.f32 0.0, %v1086
    %v1088 = vpop.f32.mrb[0].mxu0
    %v1089 = vpop.f32.mrb[0].mxu0
    %v1090 = vadd.f32 0.0, %v1089
    %v1091 = vpop.f32.mrb[0].mxu0
    %1092 = vmatprep.mubr.bf16.mxu0 0
    %1093 = vmatmul.mubr.bf16.gmra.mrb[0].mxu0 %v1023
    %v1094 = vpop.f32.mrb[0].mxu0
    %v1095 = vadd.f32 0.0, %v1094
    %v1096 = vpop.f32.mrb[0].mxu0
    %v1097 = vpop.f32.mrb[0].mxu0
    %v1098 = vadd.f32 0.0, %v1097
    %v1099 = vpop.f32.mrb[0].mxu0
    %1100 = vmatprep.mubr.bf16.mxu0 0
    %1101 = vmatmul.mubr.bf16.gmra.mrb[0].mxu0 %v1024
    %v1102 = vpop.f32.mrb[0].mxu0
    %v1103 = vadd.f32 0.0, %v1102
    %v1104 = vpop.f32.mrb[0].mxu0
    %v1105 = vpop.f32.mrb[0].mxu0
    %v1106 = vadd.f32 0.0, %v1105
    %v1107 = vpop.f32.mrb[0].mxu0
    %1108 = vmatprep.mubr.bf16.mxu0 0
    %1109 = vmatmul.mubr.bf16.gmra.mrb[0].mxu0 %v1025
    %v1110 = vpop.f32.mrb[0].mxu0
    %v1111 = vadd.f32 0.0, %v1110
    %v1112 = vpop.f32.mrb[0].mxu0
    %v1113 = vpop.f32.mrb[0].mxu0
    %v1114 = vadd.f32 0.0, %v1113
    %v1115 = vpop.f32.mrb[0].mxu0
    %1116 = vmatprep.mubr.bf16.mxu0 0
    %1117 = vmatmul.mubr.bf16.gmra.mrb[0].mxu0 %v1026
    %v1118 = vpop.f32.mrb[0].mxu0
    %v1119 = vadd.f32 0.0, %v1118
    %v1120 = vpop.f32.mrb[0].mxu0
    %v1121 = vpop.f32.mrb[0].mxu0
    %v1122 = vadd.f32 0.0, %v1121
    %v1123 = vpop.f32.mrb[0].mxu0
    %1124 = vmatprep.mubr.bf16.mxu0 0
    %1125 = vmatmul.mubr.bf16.gmra.mrb[0].mxu0 %v1027
    %v1126 = vpop.f32.mrb[0].mxu0
    %v1127 = vadd.f32 0.0, %v1126
    %v1128 = vpop.f32.mrb[0].mxu0
    %v1129 = vpop.f32.mrb[0].mxu0
    %v1130 = vadd.f32 0.0, %v1129
    %v1131 = vpop.f32.mrb[0].mxu0
    %1132 = vdwg.mxu0
    %v1133 = vsub.f32 %v1071, %v441
    %v1134 = vsub.f32 %v1074, %v441
    %v1135 = vsub.f32 %v1079, %v441
    %v1136 = vsub.f32 %v1082, %v441
    %v1137 = vsub.f32 %v1087, %v441
    %v1138 = vsub.f32 %v1090, %v441
    %v1139 = vsub.f32 %v1095, %v441
    %v1140 = vsub.f32 %v1098, %v441
    %v1141 = vsub.f32 %v1103, %v441
    %v1142 = vsub.f32 %v1106, %v441
    %v1143 = vsub.f32 %v1111, %v441
    %v1144 = vsub.f32 %v1114, %v441
    %v1145 = vsub.f32 %v1119, %v441
    %v1146 = vsub.f32 %v1122, %v441
    %v1147 = vsub.f32 %v1127, %v441
    %v1148 = vsub.f32 %v1130, %v441
    %v1149 = vmul.f32 %v1133, 1.442695
    %v1150 = vpow.pop %v1149
    %v1151 = vmul.f32 %v1134, 1.442695
    %v1152 = vpow.pop %v1151
    %v1153 = vmul.f32 %v1135, 1.442695
    %v1154 = vpow.pop %v1153
    %v1155 = vmul.f32 %v1136, 1.442695
    %v1156 = vpow.pop %v1155
    %v1157 = vmul.f32 %v1137, 1.442695
    %v1158 = vpow.pop %v1157
    %v1159 = vmul.f32 %v1138, 1.442695
    %v1160 = vpow.pop %v1159
    %v1161 = vmul.f32 %v1139, 1.442695
    %v1162 = vpow.pop %v1161
    %v1163 = vmul.f32 %v1140, 1.442695
    %v1164 = vpow.pop %v1163
    %v1165 = vmul.f32 %v1141, 1.442695
    %v1166 = vpow.pop %v1165
    %v1167 = vmul.f32 %v1142, 1.442695
    %v1168 = vpow.pop %v1167
    %v1169 = vmul.f32 %v1143, 1.442695
    %v1170 = vpow.pop %v1169
    %v1171 = vmul.f32 %v1144, 1.442695
    %v1172 = vpow.pop %v1171
    %v1173 = vmul.f32 %v1145, 1.442695
    %v1174 = vpow.pop %v1173
    %v1175 = vmul.f32 %v1146, 1.442695
    %v1176 = vpow.pop %v1175
    %v1177 = vmul.f32 %v1147, 1.442695
    %v1178 = vpow.pop %v1177
    %v1179 = vmul.f32 %v1148, 1.442695
    %v1180 = vpow.pop %v1179
    %v1181 = vsel %vm181, 0.0, %v1150
    %v1182 = vsel %vm182, 0.0, %v1152
    %v1183 = vsel %vm183, 0.0, %v1154
    %v1184 = vsel %vm184, 0.0, %v1156
    %v1185 = vsel %vm185, 0.0, %v1158
    %v1186 = vsel %vm186, 0.0, %v1160
    %v1187 = vsel %vm187, 0.0, %v1162
    %v1188 = vsel %vm188, 0.0, %v1164
    %v1189 = vsel %vm189, 0.0, %v1166
    %v1190 = vsel %vm190, 0.0, %v1168
    %v1191 = vsel %vm191, 0.0, %v1170
    %v1192 = vsel %vm192, 0.0, %v1172
    %v1193 = vsel %vm193, 0.0, %v1174
    %v1194 = vsel %vm194, 0.0, %v1176
    %v1195 = vsel %vm195, 0.0, %v1178
    %v1196 = vsel %vm196, 0.0, %v1180
    %v1197 = vadd.f32 %v459, %v1181
    %v1198 = vadd.f32 %v461, %v1182
    %v1199 = vadd.f32 %v463, %v1183
    %v1200 = vadd.f32 %v465, %v1184
    %v1201 = vadd.f32 %v467, %v1185
    %v1202 = vadd.f32 %v469, %v1186
    %v1203 = vadd.f32 %v471, %v1187
    %v1204 = vadd.f32 %v473, %v1188
    %v1205 = vadd.f32 %v475, %v1189
    %v1206 = vadd.f32 %v477, %v1190
    %v1207 = vadd.f32 %v479, %v1191
    %v1208 = vadd.f32 %v481, %v1192
    %v1209 = vadd.f32 %v483, %v1193
    %v1210 = vadd.f32 %v485, %v1194
    %v1211 = vadd.f32 %v487, %v1195
    %v1212 = vadd.f32 %v489, %v1196
    %v1213 = vmul.f32 %v1197, %v232
    %v1214 = vmul.f32 %v1198, %v233
    %v1215 = vmul.f32 %v1199, %v234
    %v1216 = vmul.f32 %v1200, %v235
    %v1217 = vmul.f32 %v1201, %v236
    %v1218 = vmul.f32 %v1202, %v237
    %v1219 = vmul.f32 %v1203, %v238
    %v1220 = vmul.f32 %v1204, %v239
    %v1221 = vmul.f32 %v1205, %v240
    %v1222 = vmul.f32 %v1206, %v241
    %v1223 = vmul.f32 %v1207, %v242
    %v1224 = vmul.f32 %v1208, %v243
    %v1225 = vmul.f32 %v1209, %v244
    %v1226 = vmul.f32 %v1210, %v245
    %v1227 = vmul.f32 %v1211, %v246
    %v1228 = vmul.f32 %v1212, %v247
    %v1229 = vld [vmem:[#allocation2] sm:$0x1]
    %v1230 = vadd.f32 %v1213, %v1214
    %v1231 = vadd.f32 %v1230, %v1215
    %v1232 = vadd.f32 %v1231, %v1216
    %v1233 = vadd.f32 %v1232, %v1217
    %v1234 = vadd.f32 %v1233, %v1218
    %v1235 = vadd.f32 %v1234, %v1219
    %v1236 = vadd.f32 %v1235, %v1220
    %v1237 = vadd.f32 %v1236, %v1221
    %v1238 = vadd.f32 %v1237, %v1222
    %v1239 = vadd.f32 %v1238, %v1223
    %v1240 = vadd.f32 %v1239, %v1224
    %v1241 = vadd.f32 %v1240, %v1225
    %v1242 = vadd.f32 %v1241, %v1226
    %v1243 = vadd.f32 %v1242, %v1227
    %v1244 = vadd.f32 %v1243, %v1228
    %v1245 = vrot.slane %v1244, 4
    %v1246 = vadd.f32 %v1244, %v1245
    %v1247 = vrot.slane %v1246, 2
    %v1248 = vadd.f32 %v1246, %v1247
    %v1249 = vrot.slane %v1248, 1
    %v1250 = vadd.f32 %v1248, %v1249
    %v1251 = vadd.f32 %v1229, %v1250
    %1252 = vst [vmem:[#allocation2] sm:$0x1] %v1251
    %v1253 = vld [vmem:[#allocation15] sm:$0xff]
    %v1254 = vld [vmem:[#allocation15 + $0x8] sm:$0xff]
    %v1255 = vld [vmem:[#allocation15 + $0x10] sm:$0xff]
    %v1256 = vld [vmem:[#allocation15 + $0x18] sm:$0xff]
    %v1257 = vld [vmem:[#allocation15 + $0x20] sm:$0xff]
    %v1258 = vld [vmem:[#allocation15 + $0x28] sm:$0xff]
    %v1259 = vld [vmem:[#allocation15 + $0x30] sm:$0xff]
    %v1260 = vld [vmem:[#allocation15 + $0x38] sm:$0xff]
    %v1261 = vld [vmem:[#allocation15 + $0x40] sm:$0xff]
    %v1262 = vld [vmem:[#allocation15 + $0x48] sm:$0xff]
    %v1263 = vld [vmem:[#allocation15 + $0x50] sm:$0xff]
    %v1264 = vld [vmem:[#allocation15 + $0x58] sm:$0xff]
    %v1265 = vld [vmem:[#allocation15 + $0x60] sm:$0xff]
    %v1266 = vld [vmem:[#allocation15 + $0x68] sm:$0xff]
    %v1267 = vld [vmem:[#allocation15 + $0x70] sm:$0xff]
    %v1268 = vld [vmem:[#allocation15 + $0x78] sm:$0xff]
    %v1269 = vmul.f32 %v827, %v1253
    %v1270 = vmul.f32 %v828, %v1254
    %v1271 = vmul.f32 %v829, %v1255
    %v1272 = vmul.f32 %v830, %v1256
    %v1273 = vmul.f32 %v831, %v1257
    %v1274 = vmul.f32 %v832, %v1258
    %v1275 = vmul.f32 %v833, %v1259
    %v1276 = vmul.f32 %v834, %v1260
    %v1277 = vmul.f32 %v835, %v1261
    %v1278 = vmul.f32 %v836, %v1262
    %v1279 = vmul.f32 %v837, %v1263
    %v1280 = vmul.f32 %v838, %v1264
    %v1281 = vmul.f32 %v839, %v1265
    %v1282 = vmul.f32 %v840, %v1266
    %v1283 = vmul.f32 %v841, %v1267
    %v1284 = vmul.f32 %v842, %v1268
    %1285 = vadd.xlane.f32.xlu0 %v1269
    %v1286 = vpop.xlane.xlu0 %1285
    %1287 = vadd.xlane.f32.xlu0 %v1270
    %v1288 = vpop.xlane.xlu0 %1287
    %1289 = vadd.xlane.f32.xlu0 %v1271
    %v1290 = vpop.xlane.xlu0 %1289
    %1291 = vadd.xlane.f32.xlu0 %v1272
    %v1292 = vpop.xlane.xlu0 %1291
    %1293 = vadd.xlane.f32.xlu0 %v1273
    %v1294 = vpop.xlane.xlu0 %1293
    %1295 = vadd.xlane.f32.xlu0 %v1274
    %v1296 = vpop.xlane.xlu0 %1295
    %1297 = vadd.xlane.f32.xlu0 %v1275
    %v1298 = vpop.xlane.xlu0 %1297
    %1299 = vadd.xlane.f32.xlu0 %v1276
    %v1300 = vpop.xlane.xlu0 %1299
    %1301 = vadd.xlane.f32.xlu0 %v1277
    %v1302 = vpop.xlane.xlu0 %1301
    %1303 = vadd.xlane.f32.xlu0 %v1278
    %v1304 = vpop.xlane.xlu0 %1303
    %1305 = vadd.xlane.f32.xlu0 %v1279
    %v1306 = vpop.xlane.xlu0 %1305
    %1307 = vadd.xlane.f32.xlu0 %v1280
    %v1308 = vpop.xlane.xlu0 %1307
    %1309 = vadd.xlane.f32.xlu0 %v1281
    %v1310 = vpop.xlane.xlu0 %1309
    %1311 = vadd.xlane.f32.xlu0 %v1282
    %v1312 = vpop.xlane.xlu0 %1311
    %1313 = vadd.xlane.f32.xlu0 %v1283
    %v1314 = vpop.xlane.xlu0 %1313
    %1315 = vadd.xlane.f32.xlu0 %v1284
    %v1316 = vpop.xlane.xlu0 %1315
    %v1317 = vmul.f32 %v843, %v1253
    %v1318 = vmul.f32 %v844, %v1254
    %v1319 = vmul.f32 %v845, %v1255
    %v1320 = vmul.f32 %v846, %v1256
    %v1321 = vmul.f32 %v847, %v1257
    %v1322 = vmul.f32 %v848, %v1258
    %v1323 = vmul.f32 %v849, %v1259
    %v1324 = vmul.f32 %v850, %v1260
    %v1325 = vmul.f32 %v851, %v1261
    %v1326 = vmul.f32 %v852, %v1262
    %v1327 = vmul.f32 %v853, %v1263
    %v1328 = vmul.f32 %v854, %v1264
    %v1329 = vmul.f32 %v855, %v1265
    %v1330 = vmul.f32 %v856, %v1266
    %v1331 = vmul.f32 %v857, %v1267
    %v1332 = vmul.f32 %v858, %v1268
    %1333 = vadd.xlane.f32.xlu0 %v1317
    %v1334 = vpop.xlane.xlu0 %1333
    %1335 = vadd.xlane.f32.xlu0 %v1318
    %v1336 = vpop.xlane.xlu0 %1335
    %1337 = vadd.xlane.f32.xlu0 %v1319
    %v1338 = vpop.xlane.xlu0 %1337
    %1339 = vadd.xlane.f32.xlu0 %v1320
    %v1340 = vpop.xlane.xlu0 %1339
    %1341 = vadd.xlane.f32.xlu0 %v1321
    %v1342 = vpop.xlane.xlu0 %1341
    %1343 = vadd.xlane.f32.xlu0 %v1322
    %v1344 = vpop.xlane.xlu0 %1343
    %1345 = vadd.xlane.f32.xlu0 %v1323
    %v1346 = vpop.xlane.xlu0 %1345
    %1347 = vadd.xlane.f32.xlu0 %v1324
    %v1348 = vpop.xlane.xlu0 %1347
    %1349 = vadd.xlane.f32.xlu0 %v1325
    %v1350 = vpop.xlane.xlu0 %1349
    %1351 = vadd.xlane.f32.xlu0 %v1326
    %v1352 = vpop.xlane.xlu0 %1351
    %1353 = vadd.xlane.f32.xlu0 %v1327
    %v1354 = vpop.xlane.xlu0 %1353
    %1355 = vadd.xlane.f32.xlu0 %v1328
    %v1356 = vpop.xlane.xlu0 %1355
    %1357 = vadd.xlane.f32.xlu0 %v1329
    %v1358 = vpop.xlane.xlu0 %1357
    %1359 = vadd.xlane.f32.xlu0 %v1330
    %v1360 = vpop.xlane.xlu0 %1359
    %1361 = vadd.xlane.f32.xlu0 %v1331
    %v1362 = vpop.xlane.xlu0 %1361
    %1363 = vadd.xlane.f32.xlu0 %v1332
    %v1364 = vpop.xlane.xlu0 %1363
    %v1365 = vsub.f32 %v1286, %v441
    %v1366 = vsub.f32 %v1288, %v441
    %v1367 = vsub.f32 %v1290, %v441
    %v1368 = vsub.f32 %v1292, %v441
    %v1369 = vsub.f32 %v1294, %v441
    %v1370 = vsub.f32 %v1296, %v441
    %v1371 = vsub.f32 %v1298, %v441
    %v1372 = vsub.f32 %v1300, %v441
    %v1373 = vsub.f32 %v1302, %v441
    %v1374 = vsub.f32 %v1304, %v441
    %v1375 = vsub.f32 %v1306, %v441
    %v1376 = vsub.f32 %v1308, %v441
    %v1377 = vsub.f32 %v1310, %v441
    %v1378 = vsub.f32 %v1312, %v441
    %v1379 = vsub.f32 %v1314, %v441
    %v1380 = vsub.f32 %v1316, %v441
    %v1381 = vmul.f32 %v1365, 1.442695
    %v1382 = vpow.pop %v1381
    %v1383 = vmul.f32 %v1366, 1.442695
    %v1384 = vpow.pop %v1383
    %v1385 = vmul.f32 %v1367, 1.442695
    %v1386 = vpow.pop %v1385
    %v1387 = vmul.f32 %v1368, 1.442695
    %v1388 = vpow.pop %v1387
    %v1389 = vmul.f32 %v1369, 1.442695
    %v1390 = vpow.pop %v1389
    %v1391 = vmul.f32 %v1370, 1.442695
    %v1392 = vpow.pop %v1391
    %v1393 = vmul.f32 %v1371, 1.442695
    %v1394 = vpow.pop %v1393
    %v1395 = vmul.f32 %v1372, 1.442695
    %v1396 = vpow.pop %v1395
    %v1397 = vmul.f32 %v1373, 1.442695
    %v1398 = vpow.pop %v1397
    %v1399 = vmul.f32 %v1374, 1.442695
    %v1400 = vpow.pop %v1399
    %v1401 = vmul.f32 %v1375, 1.442695
    %v1402 = vpow.pop %v1401
    %v1403 = vmul.f32 %v1376, 1.442695
    %v1404 = vpow.pop %v1403
    %v1405 = vmul.f32 %v1377, 1.442695
    %v1406 = vpow.pop %v1405
    %v1407 = vmul.f32 %v1378, 1.442695
    %v1408 = vpow.pop %v1407
    %v1409 = vmul.f32 %v1379, 1.442695
    %v1410 = vpow.pop %v1409
    %v1411 = vmul.f32 %v1380, 1.442695
    %v1412 = vpow.pop %v1411
    %v1413 = vsub.f32 %v1334, %v441
    %v1414 = vsub.f32 %v1336, %v441
    %v1415 = vsub.f32 %v1338, %v441
    %v1416 = vsub.f32 %v1340, %v441
    %v1417 = vsub.f32 %v1342, %v441
    %v1418 = vsub.f32 %v1344, %v441
    %v1419 = vsub.f32 %v1346, %v441
    %v1420 = vsub.f32 %v1348, %v441
    %v1421 = vsub.f32 %v1350, %v441
    %v1422 = vsub.f32 %v1352, %v441
    %v1423 = vsub.f32 %v1354, %v441
    %v1424 = vsub.f32 %v1356, %v441
    %v1425 = vsub.f32 %v1358, %v441
    %v1426 = vsub.f32 %v1360, %v441
    %v1427 = vsub.f32 %v1362, %v441
    %v1428 = vsub.f32 %v1364, %v441
    %v1429 = vmul.f32 %v1413, 1.442695
    %v1430 = vpow.pop %v1429
    %v1431 = vmul.f32 %v1414, 1.442695
    %v1432 = vpow.pop %v1431
    %v1433 = vmul.f32 %v1415, 1.442695
    %v1434 = vpow.pop %v1433
    %v1435 = vmul.f32 %v1416, 1.442695
    %v1436 = vpow.pop %v1435
    %v1437 = vmul.f32 %v1417, 1.442695
    %v1438 = vpow.pop %v1437
    %v1439 = vmul.f32 %v1418, 1.442695
    %v1440 = vpow.pop %v1439
    %v1441 = vmul.f32 %v1419, 1.442695
    %v1442 = vpow.pop %v1441
    %v1443 = vmul.f32 %v1420, 1.442695
    %v1444 = vpow.pop %v1443
    %v1445 = vmul.f32 %v1421, 1.442695
    %v1446 = vpow.pop %v1445
    %v1447 = vmul.f32 %v1422, 1.442695
    %v1448 = vpow.pop %v1447
    %v1449 = vmul.f32 %v1423, 1.442695
    %v1450 = vpow.pop %v1449
    %v1451 = vmul.f32 %v1424, 1.442695
    %v1452 = vpow.pop %v1451
    %v1453 = vmul.f32 %v1425, 1.442695
    %v1454 = vpow.pop %v1453
    %v1455 = vmul.f32 %v1426, 1.442695
    %v1456 = vpow.pop %v1455
    %v1457 = vmul.f32 %v1427, 1.442695
    %v1458 = vpow.pop %v1457
    %v1459 = vmul.f32 %v1428, 1.442695
    %v1460 = vpow.pop %v1459
    %v1461 = vmul.f32 %v1382, %v232
    %v1462 = vmul.f32 %v1384, %v233
    %v1463 = vmul.f32 %v1386, %v234
    %v1464 = vmul.f32 %v1388, %v235
    %v1465 = vmul.f32 %v1390, %v236
    %v1466 = vmul.f32 %v1392, %v237
    %v1467 = vmul.f32 %v1394, %v238
    %v1468 = vmul.f32 %v1396, %v239
    %v1469 = vmul.f32 %v1398, %v240
    %v1470 = vmul.f32 %v1400, %v241
    %v1471 = vmul.f32 %v1402, %v242
    %v1472 = vmul.f32 %v1404, %v243
    %v1473 = vmul.f32 %v1406, %v244
    %v1474 = vmul.f32 %v1408, %v245
    %v1475 = vmul.f32 %v1410, %v246
    %v1476 = vmul.f32 %v1412, %v247
    %v1477 = vmul.f32 %v1430, %v232
    %v1478 = vmul.f32 %v1432, %v233
    %v1479 = vmul.f32 %v1434, %v234
    %v1480 = vmul.f32 %v1436, %v235
    %v1481 = vmul.f32 %v1438, %v236
    %v1482 = vmul.f32 %v1440, %v237
    %v1483 = vmul.f32 %v1442, %v238
    %v1484 = vmul.f32 %v1444, %v239
    %v1485 = vmul.f32 %v1446, %v240
    %v1486 = vmul.f32 %v1448, %v241
    %v1487 = vmul.f32 %v1450, %v242
    %v1488 = vmul.f32 %v1452, %v243
    %v1489 = vmul.f32 %v1454, %v244
    %v1490 = vmul.f32 %v1456, %v245
    %v1491 = vmul.f32 %v1458, %v246
    %v1492 = vmul.f32 %v1460, %v247
    %v1493 = vld [vmem:[#allocation5] sm:$0x1]
    %v1494 = vadd.f32 %v1461, %v1462
    %v1495 = vadd.f32 %v1494, %v1463
    %v1496 = vadd.f32 %v1495, %v1464
    %v1497 = vadd.f32 %v1496, %v1465
    %v1498 = vadd.f32 %v1497, %v1466
    %v1499 = vadd.f32 %v1498, %v1467
    %v1500 = vadd.f32 %v1499, %v1468
    %v1501 = vadd.f32 %v1500, %v1469
    %v1502 = vadd.f32 %v1501, %v1470
    %v1503 = vadd.f32 %v1502, %v1471
    %v1504 = vadd.f32 %v1503, %v1472
    %v1505 = vadd.f32 %v1504, %v1473
    %v1506 = vadd.f32 %v1505, %v1474
    %v1507 = vadd.f32 %v1506, %v1475
    %v1508 = vadd.f32 %v1507, %v1476
    %v1509 = vrot.slane %v1508, 4
    %v1510 = vadd.f32 %v1508, %v1509
    %v1511 = vrot.slane %v1510, 2
    %v1512 = vadd.f32 %v1510, %v1511
    %v1513 = vrot.slane %v1512, 1
    %v1514 = vadd.f32 %v1512, %v1513
    %v1515 = vadd.f32 %v1493, %v1514
    %1516 = vst.msk [vmem:[#allocation5] sm:$0x1] %vm962, %v1515
    %v1517 = vld [vmem:[#allocation6] sm:$0x1]
    %v1518 = vadd.f32 %v1477, %v1478
    %v1519 = vadd.f32 %v1518, %v1479
    %v1520 = vadd.f32 %v1519, %v1480
    %v1521 = vadd.f32 %v1520, %v1481
    %v1522 = vadd.f32 %v1521, %v1482
    %v1523 = vadd.f32 %v1522, %v1483
    %v1524 = vadd.f32 %v1523, %v1484
    %v1525 = vadd.f32 %v1524, %v1485
    %v1526 = vadd.f32 %v1525, %v1486
    %v1527 = vadd.f32 %v1526, %v1487
    %v1528 = vadd.f32 %v1527, %v1488
    %v1529 = vadd.f32 %v1528, %v1489
    %v1530 = vadd.f32 %v1529, %v1490
    %v1531 = vadd.f32 %v1530, %v1491
    %v1532 = vadd.f32 %v1531, %v1492
    %v1533 = vrot.slane %v1532, 4
    %v1534 = vadd.f32 %v1532, %v1533
    %v1535 = vrot.slane %v1534, 2
    %v1536 = vadd.f32 %v1534, %v1535
    %v1537 = vrot.slane %v1536, 1
    %v1538 = vadd.f32 %v1536, %v1537
    %v1539 = vadd.f32 %v1517, %v1538
    %1540 = vst.msk [vmem:[#allocation6] sm:$0x1] %vm962, %v1539
    %v1541 = vld [vmem:[#allocation7] sm:$0x1]
    %v1542 = vmul.f32 %v1477, %v1413
    %v1543 = vmul.f32 %v1478, %v1414
    %v1544 = vmul.f32 %v1479, %v1415
    %v1545 = vmul.f32 %v1480, %v1416
    %v1546 = vmul.f32 %v1481, %v1417
    %v1547 = vmul.f32 %v1482, %v1418
    %v1548 = vmul.f32 %v1483, %v1419
    %v1549 = vmul.f32 %v1484, %v1420
    %v1550 = vmul.f32 %v1485, %v1421
    %v1551 = vmul.f32 %v1486, %v1422
    %v1552 = vmul.f32 %v1487, %v1423
    %v1553 = vmul.f32 %v1488, %v1424
    %v1554 = vmul.f32 %v1489, %v1425
    %v1555 = vmul.f32 %v1490, %v1426
    %v1556 = vmul.f32 %v1491, %v1427
    %v1557 = vmul.f32 %v1492, %v1428
    %v1558 = vadd.f32 %v1542, %v1543
    %v1559 = vadd.f32 %v1558, %v1544
    %v1560 = vadd.f32 %v1559, %v1545
    %v1561 = vadd.f32 %v1560, %v1546
    %v1562 = vadd.f32 %v1561, %v1547
    %v1563 = vadd.f32 %v1562, %v1548
    %v1564 = vadd.f32 %v1563, %v1549
    %v1565 = vadd.f32 %v1564, %v1550
    %v1566 = vadd.f32 %v1565, %v1551
    %v1567 = vadd.f32 %v1566, %v1552
    %v1568 = vadd.f32 %v1567, %v1553
    %v1569 = vadd.f32 %v1568, %v1554
    %v1570 = vadd.f32 %v1569, %v1555
    %v1571 = vadd.f32 %v1570, %v1556
    %v1572 = vadd.f32 %v1571, %v1557
    %v1573 = vrot.slane %v1572, 4
    %v1574 = vadd.f32 %v1572, %v1573
    %v1575 = vrot.slane %v1574, 2
    %v1576 = vadd.f32 %v1574, %v1575
    %v1577 = vrot.slane %v1576, 1
    %v1578 = vadd.f32 %v1576, %v1577
    %v1579 = vadd.f32 %v1541, %v1578
    %1580 = vst.msk [vmem:[#allocation7] sm:$0x1] %vm962, %v1579
    %v1581 = vld [vmem:[#allocation8] sm:$0x1]
    %v1582 = vmul.f32 %v1477, %v1461
    %v1583 = vmul.f32 %v1478, %v1462
    %v1584 = vmul.f32 %v1479, %v1463
    %v1585 = vmul.f32 %v1480, %v1464
    %v1586 = vmul.f32 %v1481, %v1465
    %v1587 = vmul.f32 %v1482, %v1466
    %v1588 = vmul.f32 %v1483, %v1467
    %v1589 = vmul.f32 %v1484, %v1468
    %v1590 = vmul.f32 %v1485, %v1469
    %v1591 = vmul.f32 %v1486, %v1470
    %v1592 = vmul.f32 %v1487, %v1471
    %v1593 = vmul.f32 %v1488, %v1472
    %v1594 = vmul.f32 %v1489, %v1473
    %v1595 = vmul.f32 %v1490, %v1474
    %v1596 = vmul.f32 %v1491, %v1475
    %v1597 = vmul.f32 %v1492, %v1476
    %v1598 = vadd.f32 %v1582, %v1583
    %v1599 = vadd.f32 %v1598, %v1584
    %v1600 = vadd.f32 %v1599, %v1585
    %v1601 = vadd.f32 %v1600, %v1586
    %v1602 = vadd.f32 %v1601, %v1587
    %v1603 = vadd.f32 %v1602, %v1588
    %v1604 = vadd.f32 %v1603, %v1589
    %v1605 = vadd.f32 %v1604, %v1590
    %v1606 = vadd.f32 %v1605, %v1591
    %v1607 = vadd.f32 %v1606, %v1592
    %v1608 = vadd.f32 %v1607, %v1593
    %v1609 = vadd.f32 %v1608, %v1594
    %v1610 = vadd.f32 %v1609, %v1595
    %v1611 = vadd.f32 %v1610, %v1596
    %v1612 = vadd.f32 %v1611, %v1597
    %v1613 = vrot.slane %v1612, 4
    %v1614 = vadd.f32 %v1612, %v1613
    %v1615 = vrot.slane %v1614, 2
    %v1616 = vadd.f32 %v1614, %v1615
    %v1617 = vrot.slane %v1616, 1
    %v1618 = vadd.f32 %v1616, %v1617
    %v1619 = vadd.f32 %v1581, %v1618
    %1620 = vst.msk [vmem:[#allocation8] sm:$0x1] %vm962, %v1619
    // Predicated region
    $region34: #{tpu_custom_call.1} parent=1 // pred_check
      %p1621 = pneg %p61
    $region35: #{tpu_custom_call.1} parent=1 // pred_check_branch
      %1623 = sbr.rel (%p1621) target = $region37
    $region36: #{tpu_custom_call.1} parent=1 // pred_region
      %v1624 = vld [vmem:[#allocation2] sm:$0x1]
      %v1625 = vmax.f32 %v1624, 1e-37
      %v1626 = vlog2.pop %v1625
      %v1627 = vmul.f32 %v1626, 0.6931472
      %v1628 = vadd.f32 %v441, %v1627
      %v1629 = vmul.f32 %v1628, %v199
      %vm1630 = vcmask 1040384
      %v1631 = vsel %vm1630, %v1629, 0.0
      %1632 = vadd.xlane.f32.xlu0 %v1631
      %v1633 = vpop.xlane.xlu0 %1632
      %v1634 = vld [vmem:[#allocation3] sm:$0x1]
      %v1635 = vadd.f32 %v1634, %v1633
      %v1636 = vld [vmem:[#allocation4] sm:$0x1]
      %v1637 = vmul.f32 %v1636, 2.0
      %v1638 = vsub.f32 %v1635, %v1637
      %v1639 = vrcp.pop 16.0
      %v1640 = vmul.f32 %v1638, %v1639
      %v1641 = vld [vmem:[#allocation5] sm:$0x1]
      %v1642 = vld [vmem:[#allocation6] sm:$0x1]
      %v1643 = vld [vmem:[#allocation7] sm:$0x1]
      %v1644 = vrcp.pop %v1642
      %v1645 = vmul.f32 %v1643, %v1644
      %v1646 = vlog2.pop %v1642
      %v1647 = vmul.f32 %v1646, 0.6931472
      %v1648 = vsub.f32 %v1645, %v1647
      %v1649 = vld [vmem:[#allocation8] sm:$0x1]
      %v1650 = vmul.f32 %v1642, %v1641
      %v1651 = vrcp.pop %v1650
      %v1652 = vmul.f32 %v1649, %v1651
      %v1653 = vsub.f32 %v1648, %v1652
      %v1654 = vmul.f32 %v1653, 0.5
      %v1655 = vadd.f32 %v1640, %v1654
      %1656 = vst.msk [vmem:[#allocation16] sm:$0x1] %vm962, %v1655
    $region37: #{tpu_custom_call.1} parent=1 // pred_fallthru
      _
    // Predicated region
    $region38: #{tpu_custom_call.1} parent=1 // pred_check
      _
    $region39: #{tpu_custom_call.1} parent=1 // pred_check_branch
      %1658 = sbr.rel (0) target = $region41
    $region40: #{tpu_custom_call.1} parent=1 // pred_region
      %s1660 = ssub.s32 16, 16
      %1661 = vsyncadd [#allocation12], %s1660
      %s1663 = sshll.u32 [#allocation16], 4
      %s1664 = int_to_ptr.vmem [resolvable:$true] %s1663
      %1666 = dma.vmem_to_hbm [thread:$0]  %s1664, 16, %s4, [#allocation12]
    $region41: #{tpu_custom_call.1} parent=1 // pred_fallthru
      _
    // Predicated region
    $region42: #{tpu_custom_call.1} parent=1 // pred_check
      _
    $region43: #{tpu_custom_call.1} parent=1 // pred_check_branch
      %1668 = sbr.rel (0) target = $region45
    $region44: #{tpu_custom_call.1} parent=1 // pred_region
      %1669 = dma.done [#allocation12], 16
    $region45: #{tpu_custom_call.1} parent=1 // pred_fallthru
      _
    %1670 = vsyncpa [#allocation11], 1
    %1671 = vsyncpa [#allocation14], 1
    %1672 = vsyncpa [#allocation12], 1

</llo_original>
